<compile_context>
chip_gen: v6e
topology: v6e:2x2x1
jax: 0.10.0
libtpu: 0.0.40
codegen_flags: <defaults>
</compile_context>

<pallas_src>
import functools

import jax
import jax.numpy as jnp
from jax import lax
from jax.experimental import pallas as pl
from jax.experimental.pallas import tpu as pltpu


def _classifier_kernel(tok_ref, len_ref, table_ref, whh_ref,
                       w1_ref, b1_ref, w2_ref, b2_ref,
                       out_ref, xproj_ref,
                       *, apply_softmax: bool, num_classes: int):
    S, Bb, _ = tok_ref.shape
    V, H = table_ref.shape

    # --- 1) fused embedding + input projection: ONE MXU matmul ------------------------
    #     xproj[t, b] = emb[tok[t, b]] @ W_ih^T + b_ih + b_hh  ==  one_hot @ table
    tok = tok_ref[...]                                               # (S, Bb, 1) int32
    iota_v = lax.broadcasted_iota(jnp.int32, (S, Bb, V), 2)
    one_hot = (tok == iota_v).astype(jnp.float32)                    # (S, Bb, V)
    one_hot = one_hot.reshape(S * Bb, V).astype(table_ref.dtype)     # merge major dims
    xproj_ref[...] = jnp.dot(one_hot, table_ref[...],
                             preferred_element_type=jnp.float32)     # (S*Bb, H) f32

    # --- 2) serial Elman recurrence, statically unrolled; h/g carried in registers ----
    whh = whh_ref[...]                                               # (H, H) compute dtype
    lens_m1 = len_ref[...] - 1                                       # (Bb, 1) int32
    h = jnp.zeros((Bb, H), jnp.float32)
    g = jnp.zeros((Bb, H), jnp.float32)
    for t in range(S):                                               # static unroll
        xp = xproj_ref[pl.ds(t * Bb, Bb), :]                         # (Bb, H) f32
        h = jnp.tanh(xp + jnp.dot(h.astype(whh.dtype), whh,
                                  preferred_element_type=jnp.float32))
        g = jnp.where(lens_m1 == t, h, g)                            # column_gather

    # --- 3) MLP head (dropout == identity at inference) -------------------------------
    y = jnp.dot(g.astype(w1_ref.dtype), w1_ref[...],
                preferred_element_type=jnp.float32) + b1_ref[...]
    y = jnp.maximum(y, 0.0)
    y = jnp.dot(y.astype(w2_ref.dtype), w2_ref[...],
                preferred_element_type=jnp.float32) + b2_ref[...]    # (Bb, Cp)

    if apply_softmax:
        lane = lax.broadcasted_iota(jnp.int32, y.shape, 1)
        y = jnp.where(lane < num_classes, y, -1e30)                  # mask padded lanes
        m = jnp.max(y, axis=-1, keepdims=True)
        e = jnp.exp(y - m)
        y = e * pl.reciprocal(jnp.sum(e, axis=-1, keepdims=True), approx=True)

    out_ref[...] = y.astype(out_ref.dtype)


def _round_up(x, m):
    return (x + m - 1) // m * m


def prepare_params(params, *, compute_dtype=jnp.bfloat16):
    """One-time parameter preparation (hoisted off the per-call hot path)."""
    H = params["w_hh"].shape[0]
    C = params["w2"].shape[0]
    Cp = _round_up(C, 128)                                           # lane-dense output

    # Fused embedding + input-projection table: emb @ W_ih^T + (b_ih + b_hh), shape (V, H)
    table = (params["emb"].astype(jnp.float32) @ params["w_ih"].T.astype(jnp.float32)
             + (params["b_ih"] + params["b_hh"]).astype(jnp.float32)[None, :])

    w2_pad = jnp.zeros((H, Cp), jnp.float32).at[:, :C].set(params["w2"].T.astype(jnp.float32))
    b2_pad = jnp.zeros((1, Cp), jnp.float32).at[:, :C].set(params["b2"].astype(jnp.float32)[None, :])

    return {
        "table":   table.astype(compute_dtype),                      # (V, H)
        "w_hh_t":  params["w_hh"].T.astype(compute_dtype),           # (H, H)
        "w1_t":    params["w1"].T.astype(compute_dtype),             # (H, H)
        "b1":      params["b1"].reshape(1, H).astype(jnp.float32),
        "w2_t":    w2_pad.astype(compute_dtype),                     # (H, Cp)
        "b2":      b2_pad,                                           # (1, Cp)
        "num_classes": int(C),
    }


def surname_classifier_forward(x_in, x_lengths, prep, *, apply_softmax=False,
                               max_block_b=128, core_parallel=False):
    """Forward pass matching SurnameClassifier.forward.

    x_in:       (B, S) int32 token ids
    x_lengths:  (B,)   int32 sequence lengths (or None -> use full length S)
    prep:       output of prepare_params()
    returns:    (B, num_classes) float32
    """
    B, S = x_in.shape
    table = prep["table"]
    V, H = table.shape
    Cp = prep["w2_t"].shape[1]
    C = prep["num_classes"]

    if x_lengths is None:
        x_lengths = jnp.full((B,), S, dtype=jnp.int32)
    lengths = x_lengths.astype(jnp.int32)

    # --- batch blocking: grid over batch (keep bb == B_pad or a multiple of 128) ------
    bb = _round_up(B, 8)
    if bb > max_block_b:
        bb = max_block_b                       # max_block_b must be a multiple of 128
    B_pad = _round_up(B, bb)
    if B_pad != B:
        x_in = jnp.pad(x_in, ((0, B_pad - B), (0, 0)))
        lengths = jnp.pad(lengths, (0, B_pad - B))       # padded rows: length 0
    num_blocks = B_pad // bb

    # Raw tokens go straight into the kernel (seq-major, trailing unit lane dim so the
    # in-kernel one-hot broadcast needs no relayout). Tiny: S*B*4 bytes.
    tokens = x_in.astype(jnp.int32).T.reshape(S, B_pad, 1)
    lengths2d = lengths.reshape(B_pad, 1)

    grid_spec = pltpu.PrefetchScalarGridSpec(
        num_scalar_prefetch=0,
        grid=(num_blocks,),
        in_specs=[
            pl.BlockSpec((S, bb, 1), lambda i: (0, i, 0)),           # tokens
            pl.BlockSpec((bb, 1), lambda i: (i, 0)),                 # lengths
            pl.BlockSpec((V, H), lambda i: (0, 0)),                  # emb@W_ih^T + bias
            pl.BlockSpec((H, H), lambda i: (0, 0)),                  # W_hh^T
            pl.BlockSpec((H, H), lambda i: (0, 0)),                  # W1^T
            pl.BlockSpec((1, H), lambda i: (0, 0)),                  # b1
            pl.BlockSpec((H, Cp), lambda i: (0, 0)),                 # W2^T (lane-padded)
            pl.BlockSpec((1, Cp), lambda i: (0, 0)),                 # b2  (lane-padded)
        ],
        out_specs=pl.BlockSpec((bb, Cp), lambda i: (i, 0)),
        scratch_shapes=[pltpu.VMEM((S * bb, H), jnp.float32)],       # fused input proj
    )

    dim_sem = (pltpu.CORE_PARALLEL,) if core_parallel else ("parallel",)
    kernel = functools.partial(_classifier_kernel,
                               apply_softmax=apply_softmax, num_classes=C)
    out = pl.pallas_call(
        kernel,
        out_shape=jax.ShapeDtypeStruct((B_pad, Cp), jnp.float32),
        grid_spec=grid_spec,
        compiler_params=pltpu.CompilerParams(dimension_semantics=dim_sem),
    )(tokens, lengths2d, table, prep["w_hh_t"], prep["w1_t"], prep["b1"],
      prep["w2_t"], prep["b2"])
    return out[:B, :C]


def init_params(key, num_embeddings, embedding_size, rnn_hidden_size, num_classes,
                padding_idx=0):
    keys = jax.random.split(key, 9)
    scale = 0.1
    emb = scale * jax.random.normal(keys[0], (num_embeddings, embedding_size), jnp.float32)
    emb = emb.at[padding_idx].set(0.0)  # nn.Embedding padding_idx row is zero
    return {
        "emb":  emb,
        "w_ih": scale * jax.random.normal(keys[1], (rnn_hidden_size, embedding_size), jnp.float32),
        "b_ih": scale * jax.random.normal(keys[2], (rnn_hidden_size,), jnp.float32),
        "w_hh": scale * jax.random.normal(keys[3], (rnn_hidden_size, rnn_hidden_size), jnp.float32),
        "b_hh": scale * jax.random.normal(keys[4], (rnn_hidden_size,), jnp.float32),
        "w1":   scale * jax.random.normal(keys[5], (rnn_hidden_size, rnn_hidden_size), jnp.float32),
        "b1":   scale * jax.random.normal(keys[6], (rnn_hidden_size,), jnp.float32),
        "w2":   scale * jax.random.normal(keys[7], (num_classes, rnn_hidden_size), jnp.float32),
        "b2":   scale * jax.random.normal(keys[8], (num_classes,), jnp.float32),
    }


def _reference_forward(x_in, x_lengths, params, apply_softmax=False):
    """Pure-JAX f32 reference (mirrors the PyTorch forward, dropout as identity)."""
    B, S = x_in.shape
    x = jnp.take(params["emb"], x_in, axis=0)              # (B, S, E)
    H = params["w_hh"].shape[0]
    h = jnp.zeros((B, H), jnp.float32)
    hiddens = []
    for t in range(S):
        h = jnp.tanh(x[:, t, :] @ params["w_ih"].T + params["b_ih"]
                     + h @ params["w_hh"].T + params["b_hh"])
        hiddens.append(h)
    y = jnp.stack(hiddens, axis=1)                          # (B, S, H)
    idx = x_lengths.astype(jnp.int32) - 1
    y = y[jnp.arange(B), idx]                               # column_gather
    y = jnp.maximum(y @ params["w1"].T + params["b1"], 0.0)
    y = y @ params["w2"].T + params["b2"]
    if apply_softmax:
        y = jax.nn.softmax(y, axis=1)
    return y


if __name__ == "__main__":
    # small, module-consistent shapes
    NUM_EMBEDDINGS = 64     # vocab of characters
    EMBEDDING_SIZE = 32
    RNN_HIDDEN = 32
    NUM_CLASSES = 18        # nationalities
    B, S = 8, 12

    key = jax.random.PRNGKey(0)
    k_param, k_tok, k_len = jax.random.split(key, 3)

    params = init_params(k_param, NUM_EMBEDDINGS, EMBEDDING_SIZE, RNN_HIDDEN, NUM_CLASSES)
    x_in = jax.random.randint(k_tok, (B, S), minval=1, maxval=NUM_EMBEDDINGS, dtype=jnp.int32)
    x_lengths = jax.random.randint(k_len, (B,), minval=1, maxval=S + 1, dtype=jnp.int32)

    ref = _reference_forward(x_in, x_lengths, params, apply_softmax=False)

    # f32 MXU operands: strict check against the f32 reference
    prep_f32 = prepare_params(params, compute_dtype=jnp.float32)
    out_f32 = jax.block_until_ready(
        surname_classifier_forward(x_in, x_lengths, prep_f32, apply_softmax=False))
    assert out_f32.shape == (B, NUM_CLASSES)
    assert jnp.allclose(out_f32, ref, atol=5e-3, rtol=5e-3), "f32 kernel mismatch vs reference"

    # production path: bf16 MXU operands (incl. the recurrence), f32 accumulate / elementwise
    prep_bf16 = prepare_params(params, compute_dtype=jnp.bfloat16)
    out_bf16 = jax.block_until_ready(
        surname_classifier_forward(x_in, x_lengths, prep_bf16, apply_softmax=False))
    assert jnp.allclose(out_bf16, ref, atol=3e-2, rtol=3e-2), "bf16 kernel mismatch vs reference"

    # softmax head (EUP approx reciprocal), padded class lanes masked inside the kernel
    out_sm = jax.block_until_ready(
        surname_classifier_forward(x_in, x_lengths, prep_bf16, apply_softmax=True))
    assert out_sm.shape == (B, NUM_CLASSES)
    assert jnp.allclose(jnp.sum(out_sm, axis=-1), 1.0, atol=1e-2), "softmax rows must sum to 1"
    assert jnp.allclose(out_sm, jax.nn.softmax(ref, axis=-1), atol=3e-2), "softmax mismatch"

    print("KERNEL_OK")
</pallas_src>

<mosaic_0001>
module attributes {stable_mosaic.version = 11 : i64} {
  func.func @_classifier_kernel(%arg0: i32, %arg1: memref<12x8x1xi32, #tpu.memory_space<vmem>>, %arg2: memref<8x1xi32, #tpu.memory_space<vmem>>, %arg3: memref<64x32xf32, #tpu.memory_space<vmem>>, %arg4: memref<32x32xf32, #tpu.memory_space<vmem>>, %arg5: memref<32x32xf32, #tpu.memory_space<vmem>>, %arg6: memref<1x32xf32, #tpu.memory_space<vmem>>, %arg7: memref<32x128xf32, #tpu.memory_space<vmem>>, %arg8: memref<1x128xf32, #tpu.memory_space<vmem>>, %arg9: memref<8x128xf32, #tpu.memory_space<vmem>>, %arg10: memref<96x32xf32, #tpu.memory_space<vmem>>) attributes {dimension_semantics = [#tpu.dimension_semantics<parallel>], iteration_bounds = array<i64: 1>, scalar_prefetch = 0 : i64, scratch_operands = 1 : i64, tpu.core_type = #tpu.core_type<tc>, window_params = [{transform_indices = @transform_0, window_bounds = array<i64: 12, 8, 1>}, {transform_indices = @transform_1, window_bounds = array<i64: 8, 1>}, {pipeline_mode = #tpu.pipeline_mode<synchronous>, transform_indices = @transform_2, window_bounds = array<i64: 64, 32>}, {pipeline_mode = #tpu.pipeline_mode<synchronous>, transform_indices = @transform_3, window_bounds = array<i64: 32, 32>}, {pipeline_mode = #tpu.pipeline_mode<synchronous>, transform_indices = @transform_4, window_bounds = array<i64: 32, 32>}, {pipeline_mode = #tpu.pipeline_mode<synchronous>, transform_indices = @transform_5, window_bounds = array<i64: 1, 32>}, {pipeline_mode = #tpu.pipeline_mode<synchronous>, transform_indices = @transform_6, window_bounds = array<i64: 32, 128>}, {pipeline_mode = #tpu.pipeline_mode<synchronous>, transform_indices = @transform_7, window_bounds = array<i64: 1, 128>}, {transform_indices = @transform_8, window_bounds = array<i64: 8, 128>}]} {
    %c0 = arith.constant 0 : index
    %c0_0 = arith.constant 0 : index
    %c0_1 = arith.constant 0 : index
    %0 = vector.load %arg1[%c0, %c0_0, %c0_1] : memref<12x8x1xi32, #tpu.memory_space<vmem>>, vector<12x8x1xi32>
    %1 = tpu.iota {dimensions = array<i32: 2>} : vector<12x8x64xi32>
    %2 = vector.broadcast %0 : vector<12x8x1xi32> to vector<12x8x64xi32>
    %3 = arith.cmpi eq, %2, %1 : vector<12x8x64xi32>
    %4 = arith.extui %3 : vector<12x8x64xi1> to vector<12x8x64xi32>
    %5 = arith.sitofp %4 : vector<12x8x64xi32> to vector<12x8x64xf32>
    %6 = vector.shape_cast %5 : vector<12x8x64xf32> to vector<96x64xf32>
    %c0_2 = arith.constant 0 : index
    %c0_3 = arith.constant 0 : index
    %7 = vector.load %arg3[%c0_2, %c0_3] : memref<64x32xf32, #tpu.memory_space<vmem>>, vector<64x32xf32>
    %cst = arith.constant dense<0.000000e+00> : vector<96x32xf32>
    %8 = tpu.matmul %6, %7, %cst {dimension_numbers = #tpu.dot_dimension_numbers<[1], [0], [0], [1], [0, 0, 1, 1], [], []>} : vector<96x64xf32>, vector<64x32xf32>, vector<96x32xf32> -> vector<96x32xf32>
    %c0_4 = arith.constant 0 : index
    %c0_5 = arith.constant 0 : index
    %9 = vector.load %arg10[%c0_4, %c0_5] : memref<96x32xf32, #tpu.memory_space<vmem>>, vector<96x32xf32>
    tpu.vector_store %arg10[%c0_4, %c0_5], %8 {strides = array<i32>} : memref<96x32xf32, #tpu.memory_space<vmem>>, vector<96x32xf32>,
    %c0_6 = arith.constant 0 : index
    %c0_7 = arith.constant 0 : index
    %10 = vector.load %arg4[%c0_6, %c0_7] : memref<32x32xf32, #tpu.memory_space<vmem>>, vector<32x32xf32>
    %c0_8 = arith.constant 0 : index
    %c0_9 = arith.constant 0 : index
    %11 = vector.load %arg2[%c0_8, %c0_9] : memref<8x1xi32, #tpu.memory_space<vmem>>, vector<8x1xi32>
    %c1_i32 = arith.constant 1 : i32
    %12 = vector.broadcast %c1_i32 : i32 to vector<8x1xi32>
    %13 = arith.subi %11, %12 : vector<8x1xi32>
    %cst_10 = arith.constant 0.000000e+00 : f32
    %14 = vector.broadcast %cst_10 : f32 to vector<8x32xf32>
    %cst_11 = arith.constant 0.000000e+00 : f32
    %15 = vector.broadcast %cst_11 : f32 to vector<8x32xf32>
    %c0_12 = arith.constant 0 : index
    %c0_13 = arith.constant 0 : index
    %16 = vector.load %arg10[%c0_12, %c0_13] : memref<96x32xf32, #tpu.memory_space<vmem>>, vector<8x32xf32>
    %cst_14 = arith.constant dense<0.000000e+00> : vector<8x32xf32>
    %17 = tpu.matmul %14, %10, %cst_14 {dimension_numbers = #tpu.dot_dimension_numbers<[1], [0], [0], [1], [0, 0, 1, 1], [], []>} : vector<8x32xf32>, vector<32x32xf32>, vector<8x32xf32> -> vector<8x32xf32>
    %18 = arith.addf %16, %17 : vector<8x32xf32>
    %19 = math.tanh %18 : vector<8x32xf32>
    %c0_i32 = arith.constant 0 : i32
    %20 = vector.broadcast %c0_i32 : i32 to vector<8x1xi32>
    %21 = arith.cmpi eq, %13, %20 : vector<8x1xi32>
    %22 = vector.shape_cast %21 : vector<8x1xi1> to vector<8x1xi1>
    %23 = vector.broadcast %22 : vector<8x1xi1> to vector<8x32xi1>
    %24 = arith.select %23, %19, %15 : vector<8x32xi1>, vector<8x32xf32>
    %c8 = arith.constant 8 : index
    %c0_15 = arith.constant 0 : index
    %25 = vector.load %arg10[%c8, %c0_15] : memref<96x32xf32, #tpu.memory_space<vmem>>, vector<8x32xf32>
    %cst_16 = arith.constant dense<0.000000e+00> : vector<8x32xf32>
    %26 = tpu.matmul %19, %10, %cst_16 {dimension_numbers = #tpu.dot_dimension_numbers<[1], [0], [0], [1], [0, 0, 1, 1], [], []>} : vector<8x32xf32>, vector<32x32xf32>, vector<8x32xf32> -> vector<8x32xf32>
    %27 = arith.addf %25, %26 : vector<8x32xf32>
    %28 = math.tanh %27 : vector<8x32xf32>
    %c1_i32_17 = arith.constant 1 : i32
    %29 = vector.broadcast %c1_i32_17 : i32 to vector<8x1xi32>
    %30 = arith.cmpi eq, %13, %29 : vector<8x1xi32>
    %31 = vector.shape_cast %30 : vector<8x1xi1> to vector<8x1xi1>
    %32 = vector.broadcast %31 : vector<8x1xi1> to vector<8x32xi1>
    %33 = arith.select %32, %28, %24 : vector<8x32xi1>, vector<8x32xf32>
    %c16 = arith.constant 16 : index
    %c0_18 = arith.constant 0 : index
    %34 = vector.load %arg10[%c16, %c0_18] : memref<96x32xf32, #tpu.memory_space<vmem>>, vector<8x32xf32>
    %cst_19 = arith.constant dense<0.000000e+00> : vector<8x32xf32>
    %35 = tpu.matmul %28, %10, %cst_19 {dimension_numbers = #tpu.dot_dimension_numbers<[1], [0], [0], [1], [0, 0, 1, 1], [], []>} : vector<8x32xf32>, vector<32x32xf32>, vector<8x32xf32> -> vector<8x32xf32>
    %36 = arith.addf %34, %35 : vector<8x32xf32>
    %37 = math.tanh %36 : vector<8x32xf32>
    %c2_i32 = arith.constant 2 : i32
    %38 = vector.broadcast %c2_i32 : i32 to vector<8x1xi32>
    %39 = arith.cmpi eq, %13, %38 : vector<8x1xi32>
    %40 = vector.shape_cast %39 : vector<8x1xi1> to vector<8x1xi1>
    %41 = vector.broadcast %40 : vector<8x1xi1> to vector<8x32xi1>
    %42 = arith.select %41, %37, %33 : vector<8x32xi1>, vector<8x32xf32>
    %c24 = arith.constant 24 : index
    %c0_20 = arith.constant 0 : index
    %43 = vector.load %arg10[%c24, %c0_20] : memref<96x32xf32, #tpu.memory_space<vmem>>, vector<8x32xf32>
    %cst_21 = arith.constant dense<0.000000e+00> : vector<8x32xf32>
    %44 = tpu.matmul %37, %10, %cst_21 {dimension_numbers = #tpu.dot_dimension_numbers<[1], [0], [0], [1], [0, 0, 1, 1], [], []>} : vector<8x32xf32>, vector<32x32xf32>, vector<8x32xf32> -> vector<8x32xf32>
    %45 = arith.addf %43, %44 : vector<8x32xf32>
    %46 = math.tanh %45 : vector<8x32xf32>
    %c3_i32 = arith.constant 3 : i32
    %47 = vector.broadcast %c3_i32 : i32 to vector<8x1xi32>
    %48 = arith.cmpi eq, %13, %47 : vector<8x1xi32>
    %49 = vector.shape_cast %48 : vector<8x1xi1> to vector<8x1xi1>
    %50 = vector.broadcast %49 : vector<8x1xi1> to vector<8x32xi1>
    %51 = arith.select %50, %46, %42 : vector<8x32xi1>, vector<8x32xf32>
    %c32 = arith.constant 32 : index
    %c0_22 = arith.constant 0 : index
    %52 = vector.load %arg10[%c32, %c0_22] : memref<96x32xf32, #tpu.memory_space<vmem>>, vector<8x32xf32>
    %cst_23 = arith.constant dense<0.000000e+00> : vector<8x32xf32>
    %53 = tpu.matmul %46, %10, %cst_23 {dimension_numbers = #tpu.dot_dimension_numbers<[1], [0], [0], [1], [0, 0, 1, 1], [], []>} : vector<8x32xf32>, vector<32x32xf32>, vector<8x32xf32> -> vector<8x32xf32>
    %54 = arith.addf %52, %53 : vector<8x32xf32>
    %55 = math.tanh %54 : vector<8x32xf32>
    %c4_i32 = arith.constant 4 : i32
    %56 = vector.broadcast %c4_i32 : i32 to vector<8x1xi32>
    %57 = arith.cmpi eq, %13, %56 : vector<8x1xi32>
    %58 = vector.shape_cast %57 : vector<8x1xi1> to vector<8x1xi1>
    %59 = vector.broadcast %58 : vector<8x1xi1> to vector<8x32xi1>
    %60 = arith.select %59, %55, %51 : vector<8x32xi1>, vector<8x32xf32>
    %c40 = arith.constant 40 : index
    %c0_24 = arith.constant 0 : index
    %61 = vector.load %arg10[%c40, %c0_24] : memref<96x32xf32, #tpu.memory_space<vmem>>, vector<8x32xf32>
    %cst_25 = arith.constant dense<0.000000e+00> : vector<8x32xf32>
    %62 = tpu.matmul %55, %10, %cst_25 {dimension_numbers = #tpu.dot_dimension_numbers<[1], [0], [0], [1], [0, 0, 1, 1], [], []>} : vector<8x32xf32>, vector<32x32xf32>, vector<8x32xf32> -> vector<8x32xf32>
    %63 = arith.addf %61, %62 : vector<8x32xf32>
    %64 = math.tanh %63 : vector<8x32xf32>
    %c5_i32 = arith.constant 5 : i32
    %65 = vector.broadcast %c5_i32 : i32 to vector<8x1xi32>
    %66 = arith.cmpi eq, %13, %65 : vector<8x1xi32>
    %67 = vector.shape_cast %66 : vector<8x1xi1> to vector<8x1xi1>
    %68 = vector.broadcast %67 : vector<8x1xi1> to vector<8x32xi1>
    %69 = arith.select %68, %64, %60 : vector<8x32xi1>, vector<8x32xf32>
    %c48 = arith.constant 48 : index
    %c0_26 = arith.constant 0 : index
    %70 = vector.load %arg10[%c48, %c0_26] : memref<96x32xf32, #tpu.memory_space<vmem>>, vector<8x32xf32>
    %cst_27 = arith.constant dense<0.000000e+00> : vector<8x32xf32>
    %71 = tpu.matmul %64, %10, %cst_27 {dimension_numbers = #tpu.dot_dimension_numbers<[1], [0], [0], [1], [0, 0, 1, 1], [], []>} : vector<8x32xf32>, vector<32x32xf32>, vector<8x32xf32> -> vector<8x32xf32>
    %72 = arith.addf %70, %71 : vector<8x32xf32>
    %73 = math.tanh %72 : vector<8x32xf32>
    %c6_i32 = arith.constant 6 : i32
    %74 = vector.broadcast %c6_i32 : i32 to vector<8x1xi32>
    %75 = arith.cmpi eq, %13, %74 : vector<8x1xi32>
    %76 = vector.shape_cast %75 : vector<8x1xi1> to vector<8x1xi1>
    %77 = vector.broadcast %76 : vector<8x1xi1> to vector<8x32xi1>
    %78 = arith.select %77, %73, %69 : vector<8x32xi1>, vector<8x32xf32>
    %c56 = arith.constant 56 : index
    %c0_28 = arith.constant 0 : index
    %79 = vector.load %arg10[%c56, %c0_28] : memref<96x32xf32, #tpu.memory_space<vmem>>, vector<8x32xf32>
    %cst_29 = arith.constant dense<0.000000e+00> : vector<8x32xf32>
    %80 = tpu.matmul %73, %10, %cst_29 {dimension_numbers = #tpu.dot_dimension_numbers<[1], [0], [0], [1], [0, 0, 1, 1], [], []>} : vector<8x32xf32>, vector<32x32xf32>, vector<8x32xf32> -> vector<8x32xf32>
    %81 = arith.addf %79, %80 : vector<8x32xf32>
    %82 = math.tanh %81 : vector<8x32xf32>
    %c7_i32 = arith.constant 7 : i32
    %83 = vector.broadcast %c7_i32 : i32 to vector<8x1xi32>
    %84 = arith.cmpi eq, %13, %83 : vector<8x1xi32>
    %85 = vector.shape_cast %84 : vector<8x1xi1> to vector<8x1xi1>
    %86 = vector.broadcast %85 : vector<8x1xi1> to vector<8x32xi1>
    %87 = arith.select %86, %82, %78 : vector<8x32xi1>, vector<8x32xf32>
    %c64 = arith.constant 64 : index
    %c0_30 = arith.constant 0 : index
    %88 = vector.load %arg10[%c64, %c0_30] : memref<96x32xf32, #tpu.memory_space<vmem>>, vector<8x32xf32>
    %cst_31 = arith.constant dense<0.000000e+00> : vector<8x32xf32>
    %89 = tpu.matmul %82, %10, %cst_31 {dimension_numbers = #tpu.dot_dimension_numbers<[1], [0], [0], [1], [0, 0, 1, 1], [], []>} : vector<8x32xf32>, vector<32x32xf32>, vector<8x32xf32> -> vector<8x32xf32>
    %90 = arith.addf %88, %89 : vector<8x32xf32>
    %91 = math.tanh %90 : vector<8x32xf32>
    %c8_i32 = arith.constant 8 : i32
    %92 = vector.broadcast %c8_i32 : i32 to vector<8x1xi32>
    %93 = arith.cmpi eq, %13, %92 : vector<8x1xi32>
    %94 = vector.shape_cast %93 : vector<8x1xi1> to vector<8x1xi1>
    %95 = vector.broadcast %94 : vector<8x1xi1> to vector<8x32xi1>
    %96 = arith.select %95, %91, %87 : vector<8x32xi1>, vector<8x32xf32>
    %c72 = arith.constant 72 : index
    %c0_32 = arith.constant 0 : index
    %97 = vector.load %arg10[%c72, %c0_32] : memref<96x32xf32, #tpu.memory_space<vmem>>, vector<8x32xf32>
    %cst_33 = arith.constant dense<0.000000e+00> : vector<8x32xf32>
    %98 = tpu.matmul %91, %10, %cst_33 {dimension_numbers = #tpu.dot_dimension_numbers<[1], [0], [0], [1], [0, 0, 1, 1], [], []>} : vector<8x32xf32>, vector<32x32xf32>, vector<8x32xf32> -> vector<8x32xf32>
    %99 = arith.addf %97, %98 : vector<8x32xf32>
    %100 = math.tanh %99 : vector<8x32xf32>
    %c9_i32 = arith.constant 9 : i32
    %101 = vector.broadcast %c9_i32 : i32 to vector<8x1xi32>
    %102 = arith.cmpi eq, %13, %101 : vector<8x1xi32>
    %103 = vector.shape_cast %102 : vector<8x1xi1> to vector<8x1xi1>
    %104 = vector.broadcast %103 : vector<8x1xi1> to vector<8x32xi1>
    %105 = arith.select %104, %100, %96 : vector<8x32xi1>, vector<8x32xf32>
    %c80 = arith.constant 80 : index
    %c0_34 = arith.constant 0 : index
    %106 = vector.load %arg10[%c80, %c0_34] : memref<96x32xf32, #tpu.memory_space<vmem>>, vector<8x32xf32>
    %cst_35 = arith.constant dense<0.000000e+00> : vector<8x32xf32>
    %107 = tpu.matmul %100, %10, %cst_35 {dimension_numbers = #tpu.dot_dimension_numbers<[1], [0], [0], [1], [0, 0, 1, 1], [], []>} : vector<8x32xf32>, vector<32x32xf32>, vector<8x32xf32> -> vector<8x32xf32>
    %108 = arith.addf %106, %107 : vector<8x32xf32>
    %109 = math.tanh %108 : vector<8x32xf32>
    %c10_i32 = arith.constant 10 : i32
    %110 = vector.broadcast %c10_i32 : i32 to vector<8x1xi32>
    %111 = arith.cmpi eq, %13, %110 : vector<8x1xi32>
    %112 = vector.shape_cast %111 : vector<8x1xi1> to vector<8x1xi1>
    %113 = vector.broadcast %112 : vector<8x1xi1> to vector<8x32xi1>
    %114 = arith.select %113, %109, %105 : vector<8x32xi1>, vector<8x32xf32>
    %c88 = arith.constant 88 : index
    %c0_36 = arith.constant 0 : index
    %115 = vector.load %arg10[%c88, %c0_36] : memref<96x32xf32, #tpu.memory_space<vmem>>, vector<8x32xf32>
    %cst_37 = arith.constant dense<0.000000e+00> : vector<8x32xf32>
    %116 = tpu.matmul %109, %10, %cst_37 {dimension_numbers = #tpu.dot_dimension_numbers<[1], [0], [0], [1], [0, 0, 1, 1], [], []>} : vector<8x32xf32>, vector<32x32xf32>, vector<8x32xf32> -> vector<8x32xf32>
    %117 = arith.addf %115, %116 : vector<8x32xf32>
    %118 = math.tanh %117 : vector<8x32xf32>
    %c11_i32 = arith.constant 11 : i32
    %119 = vector.broadcast %c11_i32 : i32 to vector<8x1xi32>
    %120 = arith.cmpi eq, %13, %119 : vector<8x1xi32>
    %121 = vector.shape_cast %120 : vector<8x1xi1> to vector<8x1xi1>
    %122 = vector.broadcast %121 : vector<8x1xi1> to vector<8x32xi1>
    %123 = arith.select %122, %118, %114 : vector<8x32xi1>, vector<8x32xf32>
    %c0_38 = arith.constant 0 : index
    %c0_39 = arith.constant 0 : index
    %124 = vector.load %arg5[%c0_38, %c0_39] : memref<32x32xf32, #tpu.memory_space<vmem>>, vector<32x32xf32>
    %cst_40 = arith.constant dense<0.000000e+00> : vector<8x32xf32>
    %125 = tpu.matmul %123, %124, %cst_40 {dimension_numbers = #tpu.dot_dimension_numbers<[1], [0], [0], [1], [0, 0, 1, 1], [], []>} : vector<8x32xf32>, vector<32x32xf32>, vector<8x32xf32> -> vector<8x32xf32>
    %c0_41 = arith.constant 0 : index
    %c0_42 = arith.constant 0 : index
    %126 = vector.load %arg6[%c0_41, %c0_42] : memref<1x32xf32, #tpu.memory_space<vmem>>, vector<1x32xf32>
    %127 = vector.broadcast %126 : vector<1x32xf32> to vector<8x32xf32>
    %128 = arith.addf %125, %127 : vector<8x32xf32>
    %cst_43 = arith.constant 0.000000e+00 : f32
    %129 = vector.broadcast %cst_43 : f32 to vector<8x32xf32>
    %130 = arith.maximumf %128, %129 : vector<8x32xf32>
    %c0_44 = arith.constant 0 : index
    %c0_45 = arith.constant 0 : index
    %131 = vector.load %arg7[%c0_44, %c0_45] : memref<32x128xf32, #tpu.memory_space<vmem>>, vector<32x128xf32>
    %cst_46 = arith.constant dense<0.000000e+00> : vector<8x128xf32>
    %132 = tpu.matmul %130, %131, %cst_46 {dimension_numbers = #tpu.dot_dimension_numbers<[1], [0], [0], [1], [0, 0, 1, 1], [], []>} : vector<8x32xf32>, vector<32x128xf32>, vector<8x128xf32> -> vector<8x128xf32>
    %c0_47 = arith.constant 0 : index
    %c0_48 = arith.constant 0 : index
    %133 = vector.load %arg8[%c0_47, %c0_48] : memref<1x128xf32, #tpu.memory_space<vmem>>, vector<1x128xf32>
    %134 = vector.broadcast %133 : vector<1x128xf32> to vector<8x128xf32>
    %135 = arith.addf %132, %134 : vector<8x128xf32>
    %c0_49 = arith.constant 0 : index
    %c0_50 = arith.constant 0 : index
    %136 = vector.load %arg9[%c0_49, %c0_50] : memref<8x128xf32, #tpu.memory_space<vmem>>, vector<8x128xf32>
    tpu.vector_store %arg9[%c0_49, %c0_50], %135 {strides = array<i32>} : memref<8x128xf32, #tpu.memory_space<vmem>>, vector<8x128xf32>,
    return
  }
  func.func @transform_0(%arg0: i32) -> (i32, i32, i32) {
    %c0_i32 = arith.constant 0 : i32
    %c0_i32_0 = arith.constant 0 : i32
    %c0_i32_1 = arith.constant 0 : i32
    return %c0_i32, %arg0, %c0_i32_0 : i32, i32, i32
  }
  func.func @transform_1(%arg0: i32) -> (i32, i32) {
    %c0_i32 = arith.constant 0 : i32
    %c0_i32_0 = arith.constant 0 : i32
    return %arg0, %c0_i32 : i32, i32
  }
  func.func @transform_2(%arg0: i32) -> (i32, i32) {
    %c0_i32 = arith.constant 0 : i32
    %c0_i32_0 = arith.constant 0 : i32
    %c0_i32_1 = arith.constant 0 : i32
    return %c0_i32, %c0_i32_0 : i32, i32
  }
  func.func @transform_3(%arg0: i32) -> (i32, i32) {
    %c0_i32 = arith.constant 0 : i32
    %c0_i32_0 = arith.constant 0 : i32
    %c0_i32_1 = arith.constant 0 : i32
    return %c0_i32, %c0_i32_0 : i32, i32
  }
  func.func @transform_4(%arg0: i32) -> (i32, i32) {
    %c0_i32 = arith.constant 0 : i32
    %c0_i32_0 = arith.constant 0 : i32
    %c0_i32_1 = arith.constant 0 : i32
    return %c0_i32, %c0_i32_0 : i32, i32
  }
  func.func @transform_5(%arg0: i32) -> (i32, i32) {
    %c0_i32 = arith.constant 0 : i32
    %c0_i32_0 = arith.constant 0 : i32
    %c0_i32_1 = arith.constant 0 : i32
    return %c0_i32, %c0_i32_0 : i32, i32
  }
  func.func @transform_6(%arg0: i32) -> (i32, i32) {
    %c0_i32 = arith.constant 0 : i32
    %c0_i32_0 = arith.constant 0 : i32
    %c0_i32_1 = arith.constant 0 : i32
    return %c0_i32, %c0_i32_0 : i32, i32
  }
  func.func @transform_7(%arg0: i32) -> (i32, i32) {
    %c0_i32 = arith.constant 0 : i32
    %c0_i32_0 = arith.constant 0 : i32
    %c0_i32_1 = arith.constant 0 : i32
    return %c0_i32, %c0_i32_0 : i32, i32
  }
  func.func @transform_8(%arg0: i32) -> (i32, i32) {
    %c0_i32 = arith.constant 0 : i32
    %c0_i32_0 = arith.constant 0 : i32
    return %arg0, %c0_i32 : i32, i32
  }
}

</mosaic_0001>

<llo_original>
// kernel: tpu_custom_call.1
$region0: #{tpu_custom_call.1}
  #allocation0 [shape = 'u32[]', space=smem, size = 0x4, offset = 0x4, fixed_abs, tag = 'smem constant byte address 0x4 - core index']
  #allocation1 [shape = 'u32[144,128]{1,0:T(1,128)}', space=vmem, size = 0x12000, scoped, tag = 'internal scratch']
  #allocation2 [shape = 'f32[96,32]{1,0:T(8,128)}', space=vmem, size = 0xc000, scoped, tag = 'scratch operand']
  %s0 = inlined_call_operand.vmem [shape: s32[12,8,1], index: 0, kind: input, shape index: {}]
  %s1 = inlined_call_operand.vmem [shape: s32[8,1], index: 1, kind: input, shape index: {}]
  %s2 = inlined_call_operand.vmem [shape: f32[64,32], index: 2, kind: input, shape index: {}]
  %s3 = inlined_call_operand.vmem [shape: f32[32,32], index: 3, kind: input, shape index: {}]
  %s4 = inlined_call_operand.vmem [shape: f32[32,32], index: 4, kind: input, shape index: {}]
  %s5 = inlined_call_operand.vmem [shape: f32[1,32], index: 5, kind: input, shape index: {}]
  %s6 = inlined_call_operand.vmem [shape: f32[32,128], index: 6, kind: input, shape index: {}]
  %s7 = inlined_call_operand.vmem [shape: f32[1,128], index: 7, kind: input, shape index: {}]
  %s8 = inlined_call_operand.hbm [shape: f32[8,128], index: 8, kind: output, shape index: {}]
  %s9 = sld [smem:[#allocation0]]
  $region42: #{tpu_custom_call.1} parent=0
    _
  %s11 = ssub.s32 1, %s9
  %s12 = scalar_select 0, %s11, %s9
  $region1: #{tpu_custom_call.1} parent=0
    #allocation3 [shape = 'u8[4096]{0}', space=vmem, size = 0x1000, scoped, tag = 'output window, operand 0, single buffered']
    #allocation4 [shape = 's32[1]{0}', space=sflag, size = 0x4, scoped, tag = 'scoped memory for tpu_custom_call.1']
    %13 = vsyncpa [#allocation4], 0
    // Predicated region
    $region2: #{tpu_custom_call.1} parent=1 // pred_check
      _
    $region3: #{tpu_custom_call.1} parent=1 // pred_check_branch
      %15 = sbr.rel (0) target = $region5
    $region4: #{tpu_custom_call.1} parent=1 // pred_region
      _
    $region5: #{tpu_custom_call.1} parent=1 // pred_fallthru
      _
    // Predicated region
    $region6: #{tpu_custom_call.1} parent=1 // pred_check
      _
    $region7: #{tpu_custom_call.1} parent=1 // pred_check_branch
      %17 = sbr.rel (0) target = $region9
    $region8: #{tpu_custom_call.1} parent=1 // pred_region
      _
    $region9: #{tpu_custom_call.1} parent=1 // pred_fallthru
      _
    // Predicated region
    $region10: #{tpu_custom_call.1} parent=1 // pred_check
      _
    $region11: #{tpu_custom_call.1} parent=1 // pred_check_branch
      %19 = sbr.rel (0) target = $region13
    $region12: #{tpu_custom_call.1} parent=1 // pred_region
      _
    $region13: #{tpu_custom_call.1} parent=1 // pred_fallthru
      _
    // Predicated region
    $region14: #{tpu_custom_call.1} parent=1 // pred_check
      _
    $region15: #{tpu_custom_call.1} parent=1 // pred_check_branch
      %21 = sbr.rel (0) target = $region17
    $region16: #{tpu_custom_call.1} parent=1 // pred_region
      _
    $region17: #{tpu_custom_call.1} parent=1 // pred_fallthru
      _
    // Predicated region
    $region18: #{tpu_custom_call.1} parent=1 // pred_check
      _
    $region19: #{tpu_custom_call.1} parent=1 // pred_check_branch
      %23 = sbr.rel (0) target = $region21
    $region20: #{tpu_custom_call.1} parent=1 // pred_region
      _
    $region21: #{tpu_custom_call.1} parent=1 // pred_fallthru
      _
    // Predicated region
    $region22: #{tpu_custom_call.1} parent=1 // pred_check
      _
    $region23: #{tpu_custom_call.1} parent=1 // pred_check_branch
      %25 = sbr.rel (0) target = $region25
    $region24: #{tpu_custom_call.1} parent=1 // pred_region
      _
    $region25: #{tpu_custom_call.1} parent=1 // pred_fallthru
      _
    // Predicated region
    $region26: #{tpu_custom_call.1} parent=1 // pred_check
      _
    $region27: #{tpu_custom_call.1} parent=1 // pred_check_branch
      %27 = sbr.rel (0) target = $region29
    $region28: #{tpu_custom_call.1} parent=1 // pred_region
      _
    $region29: #{tpu_custom_call.1} parent=1 // pred_fallthru
      _
    // Predicated region
    $region30: #{tpu_custom_call.1} parent=1 // pred_check
      _
    $region31: #{tpu_custom_call.1} parent=1 // pred_check_branch
      %29 = sbr.rel (0) target = $region33
    $region32: #{tpu_custom_call.1} parent=1 // pred_region
      _
    $region33: #{tpu_custom_call.1} parent=1 // pred_fallthru
      _
    %v30 = vld [vmem:[%s0] sm:$0xff]
    %v31 = vld [vmem:[%s0 + $0x8] sm:$0xff]
    %v32 = vld [vmem:[%s0 + $0x10] sm:$0xff]
    %v33 = vld [vmem:[%s0 + $0x18] sm:$0xff]
    %v34 = vld [vmem:[%s0 + $0x20] sm:$0xff]
    %v35 = vld [vmem:[%s0 + $0x28] sm:$0xff]
    %v36 = vld [vmem:[%s0 + $0x30] sm:$0xff]
    %v37 = vld [vmem:[%s0 + $0x38] sm:$0xff]
    %v38 = vld [vmem:[%s0 + $0x40] sm:$0xff]
    %v39 = vld [vmem:[%s0 + $0x48] sm:$0xff]
    %v40 = vld [vmem:[%s0 + $0x50] sm:$0xff]
    %v41 = vld [vmem:[%s0 + $0x58] sm:$0xff]
    %v42 = vlaneseq
    %v43 = vand.u32 %v42, 127
    %44 = vset.pattern.permute.xlu0 0
    %45 = vperm.xlu0 %44, %v30
    %v46 = vpop.permute.xlu0 %45
    %47 = vset.pattern.permute.xlu0 0
    %48 = vperm.xlu0 %47, %v31
    %v49 = vpop.permute.xlu0 %48
    %50 = vset.pattern.permute.xlu0 0
    %51 = vperm.xlu0 %50, %v32
    %v52 = vpop.permute.xlu0 %51
    %53 = vset.pattern.permute.xlu0 0
    %54 = vperm.xlu0 %53, %v33
    %v55 = vpop.permute.xlu0 %54
    %56 = vset.pattern.permute.xlu0 0
    %57 = vperm.xlu0 %56, %v34
    %v58 = vpop.permute.xlu0 %57
    %59 = vset.pattern.permute.xlu0 0
    %60 = vperm.xlu0 %59, %v35
    %v61 = vpop.permute.xlu0 %60
    %62 = vset.pattern.permute.xlu0 0
    %63 = vperm.xlu0 %62, %v36
    %v64 = vpop.permute.xlu0 %63
    %65 = vset.pattern.permute.xlu0 0
    %66 = vperm.xlu0 %65, %v37
    %v67 = vpop.permute.xlu0 %66
    %68 = vset.pattern.permute.xlu0 0
    %69 = vperm.xlu0 %68, %v38
    %v70 = vpop.permute.xlu0 %69
    %71 = vset.pattern.permute.xlu0 0
    %72 = vperm.xlu0 %71, %v39
    %v73 = vpop.permute.xlu0 %72
    %74 = vset.pattern.permute.xlu0 0
    %75 = vperm.xlu0 %74, %v40
    %v76 = vpop.permute.xlu0 %75
    %77 = vset.pattern.permute.xlu0 0
    %78 = vperm.xlu0 %77, %v41
    %v79 = vpop.permute.xlu0 %78
    %vm80 = vcmp.eq.s32.totalorder %v46, %v43
    %vm81 = vcmp.eq.s32.totalorder %v49, %v43
    %vm82 = vcmp.eq.s32.totalorder %v52, %v43
    %vm83 = vcmp.eq.s32.totalorder %v55, %v43
    %vm84 = vcmp.eq.s32.totalorder %v58, %v43
    %vm85 = vcmp.eq.s32.totalorder %v61, %v43
    %vm86 = vcmp.eq.s32.totalorder %v64, %v43
    %vm87 = vcmp.eq.s32.totalorder %v67, %v43
    %vm88 = vcmp.eq.s32.totalorder %v70, %v43
    %vm89 = vcmp.eq.s32.totalorder %v73, %v43
    %vm90 = vcmp.eq.s32.totalorder %v76, %v43
    %vm91 = vcmp.eq.s32.totalorder %v79, %v43
    %v92 = vsel %vm80, 1, 0
    %v93 = vsel %vm81, 1, 0
    %v94 = vsel %vm82, 1, 0
    %v95 = vsel %vm83, 1, 0
    %v96 = vsel %vm84, 1, 0
    %v97 = vsel %vm85, 1, 0
    %v98 = vsel %vm86, 1, 0
    %v99 = vsel %vm87, 1, 0
    %v100 = vsel %vm88, 1, 0
    %v101 = vsel %vm89, 1, 0
    %v102 = vsel %vm90, 1, 0
    %v103 = vsel %vm91, 1, 0
    %v104 = vcvt.s32.f32 %v92
    %v105 = vcvt.s32.f32 %v93
    %v106 = vcvt.s32.f32 %v94
    %v107 = vcvt.s32.f32 %v95
    %v108 = vcvt.s32.f32 %v96
    %v109 = vcvt.s32.f32 %v97
    %v110 = vcvt.s32.f32 %v98
    %v111 = vcvt.s32.f32 %v99
    %v112 = vcvt.s32.f32 %v100
    %v113 = vcvt.s32.f32 %v101
    %v114 = vcvt.s32.f32 %v102
    %v115 = vcvt.s32.f32 %v103
    %v116 = vld [vmem:[%s2] sm:$0xff]
    %v117 = vld [vmem:[%s2 + $0x8] sm:$0xff]
    %v118 = vld [vmem:[%s2 + $0x10] sm:$0xff]
    %v119 = vld [vmem:[%s2 + $0x18] sm:$0xff]
    %v120 = vld [vmem:[%s2 + $0x20] sm:$0xff]
    %v121 = vld [vmem:[%s2 + $0x28] sm:$0xff]
    %v122 = vld [vmem:[%s2 + $0x30] sm:$0xff]
    %v123 = vld [vmem:[%s2 + $0x38] sm:$0xff]
    %vm124 = vcmask 523264
    %v126 = vsel %vm124, %v104, 0
    %v129 = vsel %vm124, %v105, 0
    %v132 = vsel %vm124, %v106, 0
    %v135 = vsel %vm124, %v107, 0
    %v138 = vsel %vm124, %v108, 0
    %v141 = vsel %vm124, %v109, 0
    %v144 = vsel %vm124, %v110, 0
    %v147 = vsel %vm124, %v111, 0
    %v150 = vsel %vm124, %v112, 0
    %v153 = vsel %vm124, %v113, 0
    %v156 = vsel %vm124, %v114, 0
    %v159 = vsel %vm124, %v115, 0
    %161 = vmatprep.subr.mxu0 0.0
    %162 = vmatpush1.msra.mxu0 0.0
    %163 = vmatprep.subr.mxu0 0.0
    %164 = vmatpush1.msra.mxu0 0.0
    %165 = vmatprep.subr.mxu0 0.0
    %166 = vmatpush1.msra.mxu0 0.0
    %167 = vmatprep.subr.mxu0 0.0
    %168 = vmatpush1.msra.mxu0 0.0
    %169 = vmatprep.subr.mxu0 0.0
    %170 = vmatpush1.msra.mxu0 0.0
    %171 = vmatprep.subr.mxu0 0.0
    %172 = vmatpush1.msra.mxu0 0.0
    %173 = vmatprep.subr.mxu0 0.0
    %174 = vmatpush1.msra.mxu0 0.0
    %175 = vmatprep.subr.mxu0 0.0
    %176 = vmatpush1.msra.mxu0 0.0
    %177 = vmatprep.subr.mxu0 0.0
    %178 = vmatpush1.msra.mxu0 %v123
    %179 = vmatprep.subr.mxu0 0.0
    %180 = vmatpush1.msra.mxu0 %v122
    %181 = vmatprep.subr.mxu0 0.0
    %182 = vmatpush1.msra.mxu0 %v121
    %183 = vmatprep.subr.mxu0 0.0
    %184 = vmatpush1.msra.mxu0 %v120
    %185 = vmatprep.subr.mxu0 0.0
    %186 = vmatpush1.msra.mxu0 %v119
    %187 = vmatprep.subr.mxu0 0.0
    %188 = vmatpush1.msra.mxu0 %v118
    %189 = vmatprep.subr.mxu0 0.0
    %190 = vmatpush1.msra.mxu0 %v117
    %191 = vmatprep.subr.mxu0 0.0
    %192 = vmatpush1.msra.mxu0 %v116
    %193 = vmatprep.subr.mxu0 0.0
    %194 = vmatpush2.msra.mxu0 0.0
    %195 = vmatprep.subr.mxu0 0.0
    %196 = vmatpush2.msra.mxu0 0.0
    %197 = vmatprep.subr.mxu0 0.0
    %198 = vmatpush2.msra.mxu0 0.0
    %199 = vmatprep.subr.mxu0 0.0
    %200 = vmatpush2.msra.mxu0 0.0
    %201 = vmatprep.subr.mxu0 0.0
    %202 = vmatpush2.msra.mxu0 0.0
    %203 = vmatprep.subr.mxu0 0.0
    %204 = vmatpush2.msra.mxu0 0.0
    %205 = vmatprep.subr.mxu0 0.0
    %206 = vmatpush2.msra.mxu0 0.0
    %207 = vmatprep.subr.mxu0 0.0
    %208 = vmatpush2.msra.mxu0 0.0
    %209 = vmatprep.subr.mxu0 0.0
    %210 = vmatpush2.msra.mxu0 0.0
    %211 = vmatprep.subr.mxu0 0.0
    %212 = vmatpush2.msra.mxu0 0.0
    %213 = vmatprep.subr.mxu0 0.0
    %214 = vmatpush2.msra.mxu0 0.0
    %215 = vmatprep.subr.mxu0 0.0
    %216 = vmatpush2.msra.mxu0 0.0
    %217 = vmatprep.subr.mxu0 0.0
    %218 = vmatpush2.msra.mxu0 0.0
    %219 = vmatprep.subr.mxu0 0.0
    %220 = vmatpush2.msra.mxu0 0.0
    %221 = vmatprep.subr.mxu0 0.0
    %222 = vmatpush2.msra.mxu0 0.0
    %223 = vmatprep.subr.mxu0 0.0
    %224 = vmatpush2.msra.mxu0 0.0
    %225 = vmatprep.mubr.f32.mxu0 0.0
    %226 = vmatmul.mubr.f32.gmra.mxu0 %v126
    %v227 = vpop.f32.mrf.mxu0
    %v228 = vadd.f32 0.0, %v227
    %v229 = vpop.f32.mrf.mxu0
    %230 = vmatprep.mubr.f32.mxu0 0.0
    %231 = vmatmul.mubr.f32.gmra.mxu0 %v129
    %v232 = vpop.f32.mrf.mxu0
    %v233 = vadd.f32 0.0, %v232
    %v234 = vpop.f32.mrf.mxu0
    %235 = vmatprep.mubr.f32.mxu0 0.0
    %236 = vmatmul.mubr.f32.gmra.mxu0 %v132
    %v237 = vpop.f32.mrf.mxu0
    %v238 = vadd.f32 0.0, %v237
    %v239 = vpop.f32.mrf.mxu0
    %240 = vmatprep.mubr.f32.mxu0 0.0
    %241 = vmatmul.mubr.f32.gmra.mxu0 %v135
    %v242 = vpop.f32.mrf.mxu0
    %v243 = vadd.f32 0.0, %v242
    %v244 = vpop.f32.mrf.mxu0
    %245 = vmatprep.mubr.f32.mxu0 0.0
    %246 = vmatmul.mubr.f32.gmra.mxu0 %v138
    %v247 = vpop.f32.mrf.mxu0
    %v248 = vadd.f32 0.0, %v247
    %v249 = vpop.f32.mrf.mxu0
    %250 = vmatprep.mubr.f32.mxu0 0.0
    %251 = vmatmul.mubr.f32.gmra.mxu0 %v141
    %v252 = vpop.f32.mrf.mxu0
    %v253 = vadd.f32 0.0, %v252
    %v254 = vpop.f32.mrf.mxu0
    %255 = vmatprep.mubr.f32.mxu0 0.0
    %256 = vmatmul.mubr.f32.gmra.mxu0 %v144
    %v257 = vpop.f32.mrf.mxu0
    %v258 = vadd.f32 0.0, %v257
    %v259 = vpop.f32.mrf.mxu0
    %260 = vmatprep.mubr.f32.mxu0 0.0
    %261 = vmatmul.mubr.f32.gmra.mxu0 %v147
    %v262 = vpop.f32.mrf.mxu0
    %v263 = vadd.f32 0.0, %v262
    %v264 = vpop.f32.mrf.mxu0
    %265 = vmatprep.mubr.f32.mxu0 0.0
    %266 = vmatmul.mubr.f32.gmra.mxu0 %v150
    %v267 = vpop.f32.mrf.mxu0
    %v268 = vadd.f32 0.0, %v267
    %v269 = vpop.f32.mrf.mxu0
    %270 = vmatprep.mubr.f32.mxu0 0.0
    %271 = vmatmul.mubr.f32.gmra.mxu0 %v153
    %v272 = vpop.f32.mrf.mxu0
    %v273 = vadd.f32 0.0, %v272
    %v274 = vpop.f32.mrf.mxu0
    %275 = vmatprep.mubr.f32.mxu0 0.0
    %276 = vmatmul.mubr.f32.gmra.mxu0 %v156
    %v277 = vpop.f32.mrf.mxu0
    %v278 = vadd.f32 0.0, %v277
    %v279 = vpop.f32.mrf.mxu0
    %280 = vmatprep.mubr.f32.mxu0 0.0
    %281 = vmatmul.mubr.f32.gmra.mxu0 %v159
    %v282 = vpop.f32.mrf.mxu0
    %v283 = vadd.f32 0.0, %v282
    %v284 = vpop.f32.mrf.mxu0
    %285 = vdwg.mxu0
    %vm286 = vcmask 261120
    %287 = vst.msk [vmem:[#allocation2] sm:$0xff] %vm286, %v228
    %288 = vst.msk [vmem:[#allocation2 + $0x8] sm:$0xff] %vm286, %v233
    %289 = vst.msk [vmem:[#allocation2 + $0x10] sm:$0xff] %vm286, %v238
    %290 = vst.msk [vmem:[#allocation2 + $0x18] sm:$0xff] %vm286, %v243
    %291 = vst.msk [vmem:[#allocation2 + $0x20] sm:$0xff] %vm286, %v248
    %292 = vst.msk [vmem:[#allocation2 + $0x28] sm:$0xff] %vm286, %v253
    %293 = vst.msk [vmem:[#allocation2 + $0x30] sm:$0xff] %vm286, %v258
    %294 = vst.msk [vmem:[#allocation2 + $0x38] sm:$0xff] %vm286, %v263
    %295 = vst.msk [vmem:[#allocation2 + $0x40] sm:$0xff] %vm286, %v268
    %296 = vst.msk [vmem:[#allocation2 + $0x48] sm:$0xff] %vm286, %v273
    %297 = vst.msk [vmem:[#allocation2 + $0x50] sm:$0xff] %vm286, %v278
    %298 = vst.msk [vmem:[#allocation2 + $0x58] sm:$0xff] %vm286, %v283
    %v299 = vld [vmem:[%s3] sm:$0xff]
    %v300 = vld [vmem:[%s3 + $0x8] sm:$0xff]
    %v301 = vld [vmem:[%s3 + $0x10] sm:$0xff]
    %v302 = vld [vmem:[%s3 + $0x18] sm:$0xff]
    %v303 = vld [vmem:[%s1] sm:$0xff]
    %v304 = vsub.s32 %v303, 1
    %v305 = vld [vmem:[#allocation2] sm:$0xff]
    %v307 = vsel %vm286, 0.0, 0
    %309 = vmatprep.subr.mxu0 0.0
    %310 = vmatpush1.msra.mxu0 0.0
    %311 = vmatprep.subr.mxu0 0.0
    %312 = vmatpush1.msra.mxu0 0.0
    %313 = vmatprep.subr.mxu0 0.0
    %314 = vmatpush1.msra.mxu0 0.0
    %315 = vmatprep.subr.mxu0 0.0
    %316 = vmatpush1.msra.mxu0 0.0
    %317 = vmatprep.subr.mxu0 0.0
    %318 = vmatpush1.msra.mxu0 0.0
    %319 = vmatprep.subr.mxu0 0.0
    %320 = vmatpush1.msra.mxu0 0.0
    %321 = vmatprep.subr.mxu0 0.0
    %322 = vmatpush1.msra.mxu0 0.0
    %323 = vmatprep.subr.mxu0 0.0
    %324 = vmatpush1.msra.mxu0 0.0
    %325 = vmatprep.subr.mxu0 0.0
    %326 = vmatpush1.msra.mxu0 0.0
    %327 = vmatprep.subr.mxu0 0.0
    %328 = vmatpush1.msra.mxu0 0.0
    %329 = vmatprep.subr.mxu0 0.0
    %330 = vmatpush1.msra.mxu0 0.0
    %331 = vmatprep.subr.mxu0 0.0
    %332 = vmatpush1.msra.mxu0 0.0
    %333 = vmatprep.subr.mxu0 0.0
    %334 = vmatpush1.msra.mxu0 %v302
    %335 = vmatprep.subr.mxu0 0.0
    %336 = vmatpush1.msra.mxu0 %v301
    %337 = vmatprep.subr.mxu0 0.0
    %338 = vmatpush1.msra.mxu0 %v300
    %339 = vmatprep.subr.mxu0 0.0
    %340 = vmatpush1.msra.mxu0 %v299
    %341 = vmatprep.subr.mxu0 0.0
    %342 = vmatpush2.msra.mxu0 0.0
    %343 = vmatprep.subr.mxu0 0.0
    %344 = vmatpush2.msra.mxu0 0.0
    %345 = vmatprep.subr.mxu0 0.0
    %346 = vmatpush2.msra.mxu0 0.0
    %347 = vmatprep.subr.mxu0 0.0
    %348 = vmatpush2.msra.mxu0 0.0
    %349 = vmatprep.subr.mxu0 0.0
    %350 = vmatpush2.msra.mxu0 0.0
    %351 = vmatprep.subr.mxu0 0.0
    %352 = vmatpush2.msra.mxu0 0.0
    %353 = vmatprep.subr.mxu0 0.0
    %354 = vmatpush2.msra.mxu0 0.0
    %355 = vmatprep.subr.mxu0 0.0
    %356 = vmatpush2.msra.mxu0 0.0
    %357 = vmatprep.subr.mxu0 0.0
    %358 = vmatpush2.msra.mxu0 0.0
    %359 = vmatprep.subr.mxu0 0.0
    %360 = vmatpush2.msra.mxu0 0.0
    %361 = vmatprep.subr.mxu0 0.0
    %362 = vmatpush2.msra.mxu0 0.0
    %363 = vmatprep.subr.mxu0 0.0
    %364 = vmatpush2.msra.mxu0 0.0
    %365 = vmatprep.subr.mxu0 0.0
    %366 = vmatpush2.msra.mxu0 0.0
    %367 = vmatprep.subr.mxu0 0.0
    %368 = vmatpush2.msra.mxu0 0.0
    %369 = vmatprep.subr.mxu0 0.0
    %370 = vmatpush2.msra.mxu0 0.0
    %371 = vmatprep.subr.mxu0 0.0
    %372 = vmatpush2.msra.mxu0 0.0
    %373 = vmatprep.mubr.f32.mxu0 0.0
    %374 = vmatmul.mubr.f32.gmra.mxu0 %v307
    %v375 = vpop.f32.mrf.mxu0
    %v376 = vadd.f32 0.0, %v375
    %v377 = vpop.f32.mrf.mxu0
    %378 = vdwg.mxu0
    %v379 = vadd.f32 %v305, %v376
    %v380 = vtanh.pop %v379
    %vm381 = vcmp.eq.s32.totalorder %v304, 0
    %v382 = vsel %vm381, 1, 0
    %383 = vset.pattern.permute.xlu0 0
    %384 = vperm.xlu0 %383, %v382
    %v385 = vpop.permute.xlu0 %384
    %vm386 = vcmp.eq.s32.totalorder %v385, 1
    %v387 = vsel %vm386, %v380, 0.0
    %v388 = vld [vmem:[#allocation2 + $0x8] sm:$0xff]
    %v390 = vsel %vm286, %v380, 0
    %392 = vmatprep.subr.mxu0 0.0
    %393 = vmatpush1.msra.mxu0 0.0
    %394 = vmatprep.subr.mxu0 0.0
    %395 = vmatpush1.msra.mxu0 0.0
    %396 = vmatprep.subr.mxu0 0.0
    %397 = vmatpush1.msra.mxu0 0.0
    %398 = vmatprep.subr.mxu0 0.0
    %399 = vmatpush1.msra.mxu0 0.0
    %400 = vmatprep.subr.mxu0 0.0
    %401 = vmatpush1.msra.mxu0 0.0
    %402 = vmatprep.subr.mxu0 0.0
    %403 = vmatpush1.msra.mxu0 0.0
    %404 = vmatprep.subr.mxu0 0.0
    %405 = vmatpush1.msra.mxu0 0.0
    %406 = vmatprep.subr.mxu0 0.0
    %407 = vmatpush1.msra.mxu0 0.0
    %408 = vmatprep.subr.mxu0 0.0
    %409 = vmatpush1.msra.mxu0 0.0
    %410 = vmatprep.subr.mxu0 0.0
    %411 = vmatpush1.msra.mxu0 0.0
    %412 = vmatprep.subr.mxu0 0.0
    %413 = vmatpush1.msra.mxu0 0.0
    %414 = vmatprep.subr.mxu0 0.0
    %415 = vmatpush1.msra.mxu0 0.0
    %416 = vmatprep.subr.mxu0 0.0
    %417 = vmatpush1.msra.mxu0 %v302
    %418 = vmatprep.subr.mxu0 0.0
    %419 = vmatpush1.msra.mxu0 %v301
    %420 = vmatprep.subr.mxu0 0.0
    %421 = vmatpush1.msra.mxu0 %v300
    %422 = vmatprep.subr.mxu0 0.0
    %423 = vmatpush1.msra.mxu0 %v299
    %424 = vmatprep.subr.mxu0 0.0
    %425 = vmatpush2.msra.mxu0 0.0
    %426 = vmatprep.subr.mxu0 0.0
    %427 = vmatpush2.msra.mxu0 0.0
    %428 = vmatprep.subr.mxu0 0.0
    %429 = vmatpush2.msra.mxu0 0.0
    %430 = vmatprep.subr.mxu0 0.0
    %431 = vmatpush2.msra.mxu0 0.0
    %432 = vmatprep.subr.mxu0 0.0
    %433 = vmatpush2.msra.mxu0 0.0
    %434 = vmatprep.subr.mxu0 0.0
    %435 = vmatpush2.msra.mxu0 0.0
    %436 = vmatprep.subr.mxu0 0.0
    %437 = vmatpush2.msra.mxu0 0.0
    %438 = vmatprep.subr.mxu0 0.0
    %439 = vmatpush2.msra.mxu0 0.0
    %440 = vmatprep.subr.mxu0 0.0
    %441 = vmatpush2.msra.mxu0 0.0
    %442 = vmatprep.subr.mxu0 0.0
    %443 = vmatpush2.msra.mxu0 0.0
    %444 = vmatprep.subr.mxu0 0.0
    %445 = vmatpush2.msra.mxu0 0.0
    %446 = vmatprep.subr.mxu0 0.0
    %447 = vmatpush2.msra.mxu0 0.0
    %448 = vmatprep.subr.mxu0 0.0
    %449 = vmatpush2.msra.mxu0 0.0
    %450 = vmatprep.subr.mxu0 0.0
    %451 = vmatpush2.msra.mxu0 0.0
    %452 = vmatprep.subr.mxu0 0.0
    %453 = vmatpush2.msra.mxu0 0.0
    %454 = vmatprep.subr.mxu0 0.0
    %455 = vmatpush2.msra.mxu0 0.0
    %456 = vmatprep.mubr.f32.mxu0 0.0
    %457 = vmatmul.mubr.f32.gmra.mxu0 %v390
    %v458 = vpop.f32.mrf.mxu0
    %v459 = vadd.f32 0.0, %v458
    %v460 = vpop.f32.mrf.mxu0
    %461 = vdwg.mxu0
    %v462 = vadd.f32 %v388, %v459
    %v463 = vtanh.pop %v462
    %vm464 = vcmp.eq.s32.totalorder %v304, 1
    %v465 = vsel %vm464, 1, 0
    %466 = vset.pattern.permute.xlu0 0
    %467 = vperm.xlu0 %466, %v465
    %v468 = vpop.permute.xlu0 %467
    %vm469 = vcmp.eq.s32.totalorder %v468, 1
    %v470 = vsel %vm469, %v463, %v387
    %v471 = vld [vmem:[#allocation2 + $0x10] sm:$0xff]
    %v473 = vsel %vm286, %v463, 0
    %475 = vmatprep.subr.mxu0 0.0
    %476 = vmatpush1.msra.mxu0 0.0
    %477 = vmatprep.subr.mxu0 0.0
    %478 = vmatpush1.msra.mxu0 0.0
    %479 = vmatprep.subr.mxu0 0.0
    %480 = vmatpush1.msra.mxu0 0.0
    %481 = vmatprep.subr.mxu0 0.0
    %482 = vmatpush1.msra.mxu0 0.0
    %483 = vmatprep.subr.mxu0 0.0
    %484 = vmatpush1.msra.mxu0 0.0
    %485 = vmatprep.subr.mxu0 0.0
    %486 = vmatpush1.msra.mxu0 0.0
    %487 = vmatprep.subr.mxu0 0.0
    %488 = vmatpush1.msra.mxu0 0.0
    %489 = vmatprep.subr.mxu0 0.0
    %490 = vmatpush1.msra.mxu0 0.0
    %491 = vmatprep.subr.mxu0 0.0
    %492 = vmatpush1.msra.mxu0 0.0
    %493 = vmatprep.subr.mxu0 0.0
    %494 = vmatpush1.msra.mxu0 0.0
    %495 = vmatprep.subr.mxu0 0.0
    %496 = vmatpush1.msra.mxu0 0.0
    %497 = vmatprep.subr.mxu0 0.0
    %498 = vmatpush1.msra.mxu0 0.0
    %499 = vmatprep.subr.mxu0 0.0
    %500 = vmatpush1.msra.mxu0 %v302
    %501 = vmatprep.subr.mxu0 0.0
    %502 = vmatpush1.msra.mxu0 %v301
    %503 = vmatprep.subr.mxu0 0.0
    %504 = vmatpush1.msra.mxu0 %v300
    %505 = vmatprep.subr.mxu0 0.0
    %506 = vmatpush1.msra.mxu0 %v299
    %507 = vmatprep.subr.mxu0 0.0
    %508 = vmatpush2.msra.mxu0 0.0
    %509 = vmatprep.subr.mxu0 0.0
    %510 = vmatpush2.msra.mxu0 0.0
    %511 = vmatprep.subr.mxu0 0.0
    %512 = vmatpush2.msra.mxu0 0.0
    %513 = vmatprep.subr.mxu0 0.0
    %514 = vmatpush2.msra.mxu0 0.0
    %515 = vmatprep.subr.mxu0 0.0
    %516 = vmatpush2.msra.mxu0 0.0
    %517 = vmatprep.subr.mxu0 0.0
    %518 = vmatpush2.msra.mxu0 0.0
    %519 = vmatprep.subr.mxu0 0.0
    %520 = vmatpush2.msra.mxu0 0.0
    %521 = vmatprep.subr.mxu0 0.0
    %522 = vmatpush2.msra.mxu0 0.0
    %523 = vmatprep.subr.mxu0 0.0
    %524 = vmatpush2.msra.mxu0 0.0
    %525 = vmatprep.subr.mxu0 0.0
    %526 = vmatpush2.msra.mxu0 0.0
    %527 = vmatprep.subr.mxu0 0.0
    %528 = vmatpush2.msra.mxu0 0.0
    %529 = vmatprep.subr.mxu0 0.0
    %530 = vmatpush2.msra.mxu0 0.0
    %531 = vmatprep.subr.mxu0 0.0
    %532 = vmatpush2.msra.mxu0 0.0
    %533 = vmatprep.subr.mxu0 0.0
    %534 = vmatpush2.msra.mxu0 0.0
    %535 = vmatprep.subr.mxu0 0.0
    %536 = vmatpush2.msra.mxu0 0.0
    %537 = vmatprep.subr.mxu0 0.0
    %538 = vmatpush2.msra.mxu0 0.0
    %539 = vmatprep.mubr.f32.mxu0 0.0
    %540 = vmatmul.mubr.f32.gmra.mxu0 %v473
    %v541 = vpop.f32.mrf.mxu0
    %v542 = vadd.f32 0.0, %v541
    %v543 = vpop.f32.mrf.mxu0
    %544 = vdwg.mxu0
    %v545 = vadd.f32 %v471, %v542
    %v546 = vtanh.pop %v545
    %vm547 = vcmp.eq.s32.totalorder %v304, 2
    %v548 = vsel %vm547, 1, 0
    %549 = vset.pattern.permute.xlu0 0
    %550 = vperm.xlu0 %549, %v548
    %v551 = vpop.permute.xlu0 %550
    %vm552 = vcmp.eq.s32.totalorder %v551, 1
    %v553 = vsel %vm552, %v546, %v470
    %v554 = vld [vmem:[#allocation2 + $0x18] sm:$0xff]
    %v556 = vsel %vm286, %v546, 0
    %558 = vmatprep.subr.mxu0 0.0
    %559 = vmatpush1.msra.mxu0 0.0
    %560 = vmatprep.subr.mxu0 0.0
    %561 = vmatpush1.msra.mxu0 0.0
    %562 = vmatprep.subr.mxu0 0.0
    %563 = vmatpush1.msra.mxu0 0.0
    %564 = vmatprep.subr.mxu0 0.0
    %565 = vmatpush1.msra.mxu0 0.0
    %566 = vmatprep.subr.mxu0 0.0
    %567 = vmatpush1.msra.mxu0 0.0
    %568 = vmatprep.subr.mxu0 0.0
    %569 = vmatpush1.msra.mxu0 0.0
    %570 = vmatprep.subr.mxu0 0.0
    %571 = vmatpush1.msra.mxu0 0.0
    %572 = vmatprep.subr.mxu0 0.0
    %573 = vmatpush1.msra.mxu0 0.0
    %574 = vmatprep.subr.mxu0 0.0
    %575 = vmatpush1.msra.mxu0 0.0
    %576 = vmatprep.subr.mxu0 0.0
    %577 = vmatpush1.msra.mxu0 0.0
    %578 = vmatprep.subr.mxu0 0.0
    %579 = vmatpush1.msra.mxu0 0.0
    %580 = vmatprep.subr.mxu0 0.0
    %581 = vmatpush1.msra.mxu0 0.0
    %582 = vmatprep.subr.mxu0 0.0
    %583 = vmatpush1.msra.mxu0 %v302
    %584 = vmatprep.subr.mxu0 0.0
    %585 = vmatpush1.msra.mxu0 %v301
    %586 = vmatprep.subr.mxu0 0.0
    %587 = vmatpush1.msra.mxu0 %v300
    %588 = vmatprep.subr.mxu0 0.0
    %589 = vmatpush1.msra.mxu0 %v299
    %590 = vmatprep.subr.mxu0 0.0
    %591 = vmatpush2.msra.mxu0 0.0
    %592 = vmatprep.subr.mxu0 0.0
    %593 = vmatpush2.msra.mxu0 0.0
    %594 = vmatprep.subr.mxu0 0.0
    %595 = vmatpush2.msra.mxu0 0.0
    %596 = vmatprep.subr.mxu0 0.0
    %597 = vmatpush2.msra.mxu0 0.0
    %598 = vmatprep.subr.mxu0 0.0
    %599 = vmatpush2.msra.mxu0 0.0
    %600 = vmatprep.subr.mxu0 0.0
    %601 = vmatpush2.msra.mxu0 0.0
    %602 = vmatprep.subr.mxu0 0.0
    %603 = vmatpush2.msra.mxu0 0.0
    %604 = vmatprep.subr.mxu0 0.0
    %605 = vmatpush2.msra.mxu0 0.0
    %606 = vmatprep.subr.mxu0 0.0
    %607 = vmatpush2.msra.mxu0 0.0
    %608 = vmatprep.subr.mxu0 0.0
    %609 = vmatpush2.msra.mxu0 0.0
    %610 = vmatprep.subr.mxu0 0.0
    %611 = vmatpush2.msra.mxu0 0.0
    %612 = vmatprep.subr.mxu0 0.0
    %613 = vmatpush2.msra.mxu0 0.0
    %614 = vmatprep.subr.mxu0 0.0
    %615 = vmatpush2.msra.mxu0 0.0
    %616 = vmatprep.subr.mxu0 0.0
    %617 = vmatpush2.msra.mxu0 0.0
    %618 = vmatprep.subr.mxu0 0.0
    %619 = vmatpush2.msra.mxu0 0.0
    %620 = vmatprep.subr.mxu0 0.0
    %621 = vmatpush2.msra.mxu0 0.0
    %622 = vmatprep.mubr.f32.mxu0 0.0
    %623 = vmatmul.mubr.f32.gmra.mxu0 %v556
    %v624 = vpop.f32.mrf.mxu0
    %v625 = vadd.f32 0.0, %v624
    %v626 = vpop.f32.mrf.mxu0
    %627 = vdwg.mxu0
    %v628 = vadd.f32 %v554, %v625
    %v629 = vtanh.pop %v628
    %vm630 = vcmp.eq.s32.totalorder %v304, 3
    %v631 = vsel %vm630, 1, 0
    %632 = vset.pattern.permute.xlu0 0
    %633 = vperm.xlu0 %632, %v631
    %v634 = vpop.permute.xlu0 %633
    %vm635 = vcmp.eq.s32.totalorder %v634, 1
    %v636 = vsel %vm635, %v629, %v553
    %v637 = vld [vmem:[#allocation2 + $0x20] sm:$0xff]
    %v639 = vsel %vm286, %v629, 0
    %641 = vmatprep.subr.mxu0 0.0
    %642 = vmatpush1.msra.mxu0 0.0
    %643 = vmatprep.subr.mxu0 0.0
    %644 = vmatpush1.msra.mxu0 0.0
    %645 = vmatprep.subr.mxu0 0.0
    %646 = vmatpush1.msra.mxu0 0.0
    %647 = vmatprep.subr.mxu0 0.0
    %648 = vmatpush1.msra.mxu0 0.0
    %649 = vmatprep.subr.mxu0 0.0
    %650 = vmatpush1.msra.mxu0 0.0
    %651 = vmatprep.subr.mxu0 0.0
    %652 = vmatpush1.msra.mxu0 0.0
    %653 = vmatprep.subr.mxu0 0.0
    %654 = vmatpush1.msra.mxu0 0.0
    %655 = vmatprep.subr.mxu0 0.0
    %656 = vmatpush1.msra.mxu0 0.0
    %657 = vmatprep.subr.mxu0 0.0
    %658 = vmatpush1.msra.mxu0 0.0
    %659 = vmatprep.subr.mxu0 0.0
    %660 = vmatpush1.msra.mxu0 0.0
    %661 = vmatprep.subr.mxu0 0.0
    %662 = vmatpush1.msra.mxu0 0.0
    %663 = vmatprep.subr.mxu0 0.0
    %664 = vmatpush1.msra.mxu0 0.0
    %665 = vmatprep.subr.mxu0 0.0
    %666 = vmatpush1.msra.mxu0 %v302
    %667 = vmatprep.subr.mxu0 0.0
    %668 = vmatpush1.msra.mxu0 %v301
    %669 = vmatprep.subr.mxu0 0.0
    %670 = vmatpush1.msra.mxu0 %v300
    %671 = vmatprep.subr.mxu0 0.0
    %672 = vmatpush1.msra.mxu0 %v299
    %673 = vmatprep.subr.mxu0 0.0
    %674 = vmatpush2.msra.mxu0 0.0
    %675 = vmatprep.subr.mxu0 0.0
    %676 = vmatpush2.msra.mxu0 0.0
    %677 = vmatprep.subr.mxu0 0.0
    %678 = vmatpush2.msra.mxu0 0.0
    %679 = vmatprep.subr.mxu0 0.0
    %680 = vmatpush2.msra.mxu0 0.0
    %681 = vmatprep.subr.mxu0 0.0
    %682 = vmatpush2.msra.mxu0 0.0
    %683 = vmatprep.subr.mxu0 0.0
    %684 = vmatpush2.msra.mxu0 0.0
    %685 = vmatprep.subr.mxu0 0.0
    %686 = vmatpush2.msra.mxu0 0.0
    %687 = vmatprep.subr.mxu0 0.0
    %688 = vmatpush2.msra.mxu0 0.0
    %689 = vmatprep.subr.mxu0 0.0
    %690 = vmatpush2.msra.mxu0 0.0
    %691 = vmatprep.subr.mxu0 0.0
    %692 = vmatpush2.msra.mxu0 0.0
    %693 = vmatprep.subr.mxu0 0.0
    %694 = vmatpush2.msra.mxu0 0.0
    %695 = vmatprep.subr.mxu0 0.0
    %696 = vmatpush2.msra.mxu0 0.0
    %697 = vmatprep.subr.mxu0 0.0
    %698 = vmatpush2.msra.mxu0 0.0
    %699 = vmatprep.subr.mxu0 0.0
    %700 = vmatpush2.msra.mxu0 0.0
    %701 = vmatprep.subr.mxu0 0.0
    %702 = vmatpush2.msra.mxu0 0.0
    %703 = vmatprep.subr.mxu0 0.0
    %704 = vmatpush2.msra.mxu0 0.0
    %705 = vmatprep.mubr.f32.mxu0 0.0
    %706 = vmatmul.mubr.f32.gmra.mxu0 %v639
    %v707 = vpop.f32.mrf.mxu0
    %v708 = vadd.f32 0.0, %v707
    %v709 = vpop.f32.mrf.mxu0
    %710 = vdwg.mxu0
    %v711 = vadd.f32 %v637, %v708
    %v712 = vtanh.pop %v711
    %vm713 = vcmp.eq.s32.totalorder %v304, 4
    %v714 = vsel %vm713, 1, 0
    %715 = vset.pattern.permute.xlu0 0
    %716 = vperm.xlu0 %715, %v714
    %v717 = vpop.permute.xlu0 %716
    %vm718 = vcmp.eq.s32.totalorder %v717, 1
    %v719 = vsel %vm718, %v712, %v636
    %v720 = vld [vmem:[#allocation2 + $0x28] sm:$0xff]
    %v722 = vsel %vm286, %v712, 0
    %724 = vmatprep.subr.mxu0 0.0
    %725 = vmatpush1.msra.mxu0 0.0
    %726 = vmatprep.subr.mxu0 0.0
    %727 = vmatpush1.msra.mxu0 0.0
    %728 = vmatprep.subr.mxu0 0.0
    %729 = vmatpush1.msra.mxu0 0.0
    %730 = vmatprep.subr.mxu0 0.0
    %731 = vmatpush1.msra.mxu0 0.0
    %732 = vmatprep.subr.mxu0 0.0
    %733 = vmatpush1.msra.mxu0 0.0
    %734 = vmatprep.subr.mxu0 0.0
    %735 = vmatpush1.msra.mxu0 0.0
    %736 = vmatprep.subr.mxu0 0.0
    %737 = vmatpush1.msra.mxu0 0.0
    %738 = vmatprep.subr.mxu0 0.0
    %739 = vmatpush1.msra.mxu0 0.0
    %740 = vmatprep.subr.mxu0 0.0
    %741 = vmatpush1.msra.mxu0 0.0
    %742 = vmatprep.subr.mxu0 0.0
    %743 = vmatpush1.msra.mxu0 0.0
    %744 = vmatprep.subr.mxu0 0.0
    %745 = vmatpush1.msra.mxu0 0.0
    %746 = vmatprep.subr.mxu0 0.0
    %747 = vmatpush1.msra.mxu0 0.0
    %748 = vmatprep.subr.mxu0 0.0
    %749 = vmatpush1.msra.mxu0 %v302
    %750 = vmatprep.subr.mxu0 0.0
    %751 = vmatpush1.msra.mxu0 %v301
    %752 = vmatprep.subr.mxu0 0.0
    %753 = vmatpush1.msra.mxu0 %v300
    %754 = vmatprep.subr.mxu0 0.0
    %755 = vmatpush1.msra.mxu0 %v299
    %756 = vmatprep.subr.mxu0 0.0
    %757 = vmatpush2.msra.mxu0 0.0
    %758 = vmatprep.subr.mxu0 0.0
    %759 = vmatpush2.msra.mxu0 0.0
    %760 = vmatprep.subr.mxu0 0.0
    %761 = vmatpush2.msra.mxu0 0.0
    %762 = vmatprep.subr.mxu0 0.0
    %763 = vmatpush2.msra.mxu0 0.0
    %764 = vmatprep.subr.mxu0 0.0
    %765 = vmatpush2.msra.mxu0 0.0
    %766 = vmatprep.subr.mxu0 0.0
    %767 = vmatpush2.msra.mxu0 0.0
    %768 = vmatprep.subr.mxu0 0.0
    %769 = vmatpush2.msra.mxu0 0.0
    %770 = vmatprep.subr.mxu0 0.0
    %771 = vmatpush2.msra.mxu0 0.0
    %772 = vmatprep.subr.mxu0 0.0
    %773 = vmatpush2.msra.mxu0 0.0
    %774 = vmatprep.subr.mxu0 0.0
    %775 = vmatpush2.msra.mxu0 0.0
    %776 = vmatprep.subr.mxu0 0.0
    %777 = vmatpush2.msra.mxu0 0.0
    %778 = vmatprep.subr.mxu0 0.0
    %779 = vmatpush2.msra.mxu0 0.0
    %780 = vmatprep.subr.mxu0 0.0
    %781 = vmatpush2.msra.mxu0 0.0
    %782 = vmatprep.subr.mxu0 0.0
    %783 = vmatpush2.msra.mxu0 0.0
    %784 = vmatprep.subr.mxu0 0.0
    %785 = vmatpush2.msra.mxu0 0.0
    %786 = vmatprep.subr.mxu0 0.0
    %787 = vmatpush2.msra.mxu0 0.0
    %788 = vmatprep.mubr.f32.mxu0 0.0
    %789 = vmatmul.mubr.f32.gmra.mxu0 %v722
    %v790 = vpop.f32.mrf.mxu0
    %v791 = vadd.f32 0.0, %v790
    %v792 = vpop.f32.mrf.mxu0
    %793 = vdwg.mxu0
    %v794 = vadd.f32 %v720, %v791
    %v795 = vtanh.pop %v794
    %vm796 = vcmp.eq.s32.totalorder %v304, 5
    %v797 = vsel %vm796, 1, 0
    %798 = vset.pattern.permute.xlu0 0
    %799 = vperm.xlu0 %798, %v797
    %v800 = vpop.permute.xlu0 %799
    %vm801 = vcmp.eq.s32.totalorder %v800, 1
    %v802 = vsel %vm801, %v795, %v719
    %v803 = vld [vmem:[#allocation2 + $0x30] sm:$0xff]
    %v805 = vsel %vm286, %v795, 0
    %807 = vmatprep.subr.mxu0 0.0
    %808 = vmatpush1.msra.mxu0 0.0
    %809 = vmatprep.subr.mxu0 0.0
    %810 = vmatpush1.msra.mxu0 0.0
    %811 = vmatprep.subr.mxu0 0.0
    %812 = vmatpush1.msra.mxu0 0.0
    %813 = vmatprep.subr.mxu0 0.0
    %814 = vmatpush1.msra.mxu0 0.0
    %815 = vmatprep.subr.mxu0 0.0
    %816 = vmatpush1.msra.mxu0 0.0
    %817 = vmatprep.subr.mxu0 0.0
    %818 = vmatpush1.msra.mxu0 0.0
    %819 = vmatprep.subr.mxu0 0.0
    %820 = vmatpush1.msra.mxu0 0.0
    %821 = vmatprep.subr.mxu0 0.0
    %822 = vmatpush1.msra.mxu0 0.0
    %823 = vmatprep.subr.mxu0 0.0
    %824 = vmatpush1.msra.mxu0 0.0
    %825 = vmatprep.subr.mxu0 0.0
    %826 = vmatpush1.msra.mxu0 0.0
    %827 = vmatprep.subr.mxu0 0.0
    %828 = vmatpush1.msra.mxu0 0.0
    %829 = vmatprep.subr.mxu0 0.0
    %830 = vmatpush1.msra.mxu0 0.0
    %831 = vmatprep.subr.mxu0 0.0
    %832 = vmatpush1.msra.mxu0 %v302
    %833 = vmatprep.subr.mxu0 0.0
    %834 = vmatpush1.msra.mxu0 %v301
    %835 = vmatprep.subr.mxu0 0.0
    %836 = vmatpush1.msra.mxu0 %v300
    %837 = vmatprep.subr.mxu0 0.0
    %838 = vmatpush1.msra.mxu0 %v299
    %839 = vmatprep.subr.mxu0 0.0
    %840 = vmatpush2.msra.mxu0 0.0
    %841 = vmatprep.subr.mxu0 0.0
    %842 = vmatpush2.msra.mxu0 0.0
    %843 = vmatprep.subr.mxu0 0.0
    %844 = vmatpush2.msra.mxu0 0.0
    %845 = vmatprep.subr.mxu0 0.0
    %846 = vmatpush2.msra.mxu0 0.0
    %847 = vmatprep.subr.mxu0 0.0
    %848 = vmatpush2.msra.mxu0 0.0
    %849 = vmatprep.subr.mxu0 0.0
    %850 = vmatpush2.msra.mxu0 0.0
    %851 = vmatprep.subr.mxu0 0.0
    %852 = vmatpush2.msra.mxu0 0.0
    %853 = vmatprep.subr.mxu0 0.0
    %854 = vmatpush2.msra.mxu0 0.0
    %855 = vmatprep.subr.mxu0 0.0
    %856 = vmatpush2.msra.mxu0 0.0
    %857 = vmatprep.subr.mxu0 0.0
    %858 = vmatpush2.msra.mxu0 0.0
    %859 = vmatprep.subr.mxu0 0.0
    %860 = vmatpush2.msra.mxu0 0.0
    %861 = vmatprep.subr.mxu0 0.0
    %862 = vmatpush2.msra.mxu0 0.0
    %863 = vmatprep.subr.mxu0 0.0
    %864 = vmatpush2.msra.mxu0 0.0
    %865 = vmatprep.subr.mxu0 0.0
    %866 = vmatpush2.msra.mxu0 0.0
    %867 = vmatprep.subr.mxu0 0.0
    %868 = vmatpush2.msra.mxu0 0.0
    %869 = vmatprep.subr.mxu0 0.0
    %870 = vmatpush2.msra.mxu0 0.0
    %871 = vmatprep.mubr.f32.mxu0 0.0
    %872 = vmatmul.mubr.f32.gmra.mxu0 %v805
    %v873 = vpop.f32.mrf.mxu0
    %v874 = vadd.f32 0.0, %v873
    %v875 = vpop.f32.mrf.mxu0
    %876 = vdwg.mxu0
    %v877 = vadd.f32 %v803, %v874
    %v878 = vtanh.pop %v877
    %vm879 = vcmp.eq.s32.totalorder %v304, 6
    %v880 = vsel %vm879, 1, 0
    %881 = vset.pattern.permute.xlu0 0
    %882 = vperm.xlu0 %881, %v880
    %v883 = vpop.permute.xlu0 %882
    %vm884 = vcmp.eq.s32.totalorder %v883, 1
    %v885 = vsel %vm884, %v878, %v802
    %v886 = vld [vmem:[#allocation2 + $0x38] sm:$0xff]
    %v888 = vsel %vm286, %v878, 0
    %890 = vmatprep.subr.mxu0 0.0
    %891 = vmatpush1.msra.mxu0 0.0
    %892 = vmatprep.subr.mxu0 0.0
    %893 = vmatpush1.msra.mxu0 0.0
    %894 = vmatprep.subr.mxu0 0.0
    %895 = vmatpush1.msra.mxu0 0.0
    %896 = vmatprep.subr.mxu0 0.0
    %897 = vmatpush1.msra.mxu0 0.0
    %898 = vmatprep.subr.mxu0 0.0
    %899 = vmatpush1.msra.mxu0 0.0
    %900 = vmatprep.subr.mxu0 0.0
    %901 = vmatpush1.msra.mxu0 0.0
    %902 = vmatprep.subr.mxu0 0.0
    %903 = vmatpush1.msra.mxu0 0.0
    %904 = vmatprep.subr.mxu0 0.0
    %905 = vmatpush1.msra.mxu0 0.0
    %906 = vmatprep.subr.mxu0 0.0
    %907 = vmatpush1.msra.mxu0 0.0
    %908 = vmatprep.subr.mxu0 0.0
    %909 = vmatpush1.msra.mxu0 0.0
    %910 = vmatprep.subr.mxu0 0.0
    %911 = vmatpush1.msra.mxu0 0.0
    %912 = vmatprep.subr.mxu0 0.0
    %913 = vmatpush1.msra.mxu0 0.0
    %914 = vmatprep.subr.mxu0 0.0
    %915 = vmatpush1.msra.mxu0 %v302
    %916 = vmatprep.subr.mxu0 0.0
    %917 = vmatpush1.msra.mxu0 %v301
    %918 = vmatprep.subr.mxu0 0.0
    %919 = vmatpush1.msra.mxu0 %v300
    %920 = vmatprep.subr.mxu0 0.0
    %921 = vmatpush1.msra.mxu0 %v299
    %922 = vmatprep.subr.mxu0 0.0
    %923 = vmatpush2.msra.mxu0 0.0
    %924 = vmatprep.subr.mxu0 0.0
    %925 = vmatpush2.msra.mxu0 0.0
    %926 = vmatprep.subr.mxu0 0.0
    %927 = vmatpush2.msra.mxu0 0.0
    %928 = vmatprep.subr.mxu0 0.0
    %929 = vmatpush2.msra.mxu0 0.0
    %930 = vmatprep.subr.mxu0 0.0
    %931 = vmatpush2.msra.mxu0 0.0
    %932 = vmatprep.subr.mxu0 0.0
    %933 = vmatpush2.msra.mxu0 0.0
    %934 = vmatprep.subr.mxu0 0.0
    %935 = vmatpush2.msra.mxu0 0.0
    %936 = vmatprep.subr.mxu0 0.0
    %937 = vmatpush2.msra.mxu0 0.0
    %938 = vmatprep.subr.mxu0 0.0
    %939 = vmatpush2.msra.mxu0 0.0
    %940 = vmatprep.subr.mxu0 0.0
    %941 = vmatpush2.msra.mxu0 0.0
    %942 = vmatprep.subr.mxu0 0.0
    %943 = vmatpush2.msra.mxu0 0.0
    %944 = vmatprep.subr.mxu0 0.0
    %945 = vmatpush2.msra.mxu0 0.0
    %946 = vmatprep.subr.mxu0 0.0
    %947 = vmatpush2.msra.mxu0 0.0
    %948 = vmatprep.subr.mxu0 0.0
    %949 = vmatpush2.msra.mxu0 0.0
    %950 = vmatprep.subr.mxu0 0.0
    %951 = vmatpush2.msra.mxu0 0.0
    %952 = vmatprep.subr.mxu0 0.0
    %953 = vmatpush2.msra.mxu0 0.0
    %954 = vmatprep.mubr.f32.mxu0 0.0
    %955 = vmatmul.mubr.f32.gmra.mxu0 %v888
    %v956 = vpop.f32.mrf.mxu0
    %v957 = vadd.f32 0.0, %v956
    %v958 = vpop.f32.mrf.mxu0
    %959 = vdwg.mxu0
    %v960 = vadd.f32 %v886, %v957
    %v961 = vtanh.pop %v960
    %vm962 = vcmp.eq.s32.totalorder %v304, 7
    %v963 = vsel %vm962, 1, 0
    %964 = vset.pattern.permute.xlu0 0
    %965 = vperm.xlu0 %964, %v963
    %v966 = vpop.permute.xlu0 %965
    %vm967 = vcmp.eq.s32.totalorder %v966, 1
    %v968 = vsel %vm967, %v961, %v885
    %v969 = vld [vmem:[#allocation2 + $0x40] sm:$0xff]
    %v971 = vsel %vm286, %v961, 0
    %973 = vmatprep.subr.mxu0 0.0
    %974 = vmatpush1.msra.mxu0 0.0
    %975 = vmatprep.subr.mxu0 0.0
    %976 = vmatpush1.msra.mxu0 0.0
    %977 = vmatprep.subr.mxu0 0.0
    %978 = vmatpush1.msra.mxu0 0.0
    %979 = vmatprep.subr.mxu0 0.0
    %980 = vmatpush1.msra.mxu0 0.0
    %981 = vmatprep.subr.mxu0 0.0
    %982 = vmatpush1.msra.mxu0 0.0
    %983 = vmatprep.subr.mxu0 0.0
    %984 = vmatpush1.msra.mxu0 0.0
    %985 = vmatprep.subr.mxu0 0.0
    %986 = vmatpush1.msra.mxu0 0.0
    %987 = vmatprep.subr.mxu0 0.0
    %988 = vmatpush1.msra.mxu0 0.0
    %989 = vmatprep.subr.mxu0 0.0
    %990 = vmatpush1.msra.mxu0 0.0
    %991 = vmatprep.subr.mxu0 0.0
    %992 = vmatpush1.msra.mxu0 0.0
    %993 = vmatprep.subr.mxu0 0.0
    %994 = vmatpush1.msra.mxu0 0.0
    %995 = vmatprep.subr.mxu0 0.0
    %996 = vmatpush1.msra.mxu0 0.0
    %997 = vmatprep.subr.mxu0 0.0
    %998 = vmatpush1.msra.mxu0 %v302
    %999 = vmatprep.subr.mxu0 0.0
    %1000 = vmatpush1.msra.mxu0 %v301
    %1001 = vmatprep.subr.mxu0 0.0
    %1002 = vmatpush1.msra.mxu0 %v300
    %1003 = vmatprep.subr.mxu0 0.0
    %1004 = vmatpush1.msra.mxu0 %v299
    %1005 = vmatprep.subr.mxu0 0.0
    %1006 = vmatpush2.msra.mxu0 0.0
    %1007 = vmatprep.subr.mxu0 0.0
    %1008 = vmatpush2.msra.mxu0 0.0
    %1009 = vmatprep.subr.mxu0 0.0
    %1010 = vmatpush2.msra.mxu0 0.0
    %1011 = vmatprep.subr.mxu0 0.0
    %1012 = vmatpush2.msra.mxu0 0.0
    %1013 = vmatprep.subr.mxu0 0.0
    %1014 = vmatpush2.msra.mxu0 0.0
    %1015 = vmatprep.subr.mxu0 0.0
    %1016 = vmatpush2.msra.mxu0 0.0
    %1017 = vmatprep.subr.mxu0 0.0
    %1018 = vmatpush2.msra.mxu0 0.0
    %1019 = vmatprep.subr.mxu0 0.0
    %1020 = vmatpush2.msra.mxu0 0.0
    %1021 = vmatprep.subr.mxu0 0.0
    %1022 = vmatpush2.msra.mxu0 0.0
    %1023 = vmatprep.subr.mxu0 0.0
    %1024 = vmatpush2.msra.mxu0 0.0
    %1025 = vmatprep.subr.mxu0 0.0
    %1026 = vmatpush2.msra.mxu0 0.0
    %1027 = vmatprep.subr.mxu0 0.0
    %1028 = vmatpush2.msra.mxu0 0.0
    %1029 = vmatprep.subr.mxu0 0.0
    %1030 = vmatpush2.msra.mxu0 0.0
    %1031 = vmatprep.subr.mxu0 0.0
    %1032 = vmatpush2.msra.mxu0 0.0
    %1033 = vmatprep.subr.mxu0 0.0
    %1034 = vmatpush2.msra.mxu0 0.0
    %1035 = vmatprep.subr.mxu0 0.0
    %1036 = vmatpush2.msra.mxu0 0.0
    %1037 = vmatprep.mubr.f32.mxu0 0.0
    %1038 = vmatmul.mubr.f32.gmra.mxu0 %v971
    %v1039 = vpop.f32.mrf.mxu0
    %v1040 = vadd.f32 0.0, %v1039
    %v1041 = vpop.f32.mrf.mxu0
    %1042 = vdwg.mxu0
    %v1043 = vadd.f32 %v969, %v1040
    %v1044 = vtanh.pop %v1043
    %vm1045 = vcmp.eq.s32.totalorder %v304, 8
    %v1046 = vsel %vm1045, 1, 0
    %1047 = vset.pattern.permute.xlu0 0
    %1048 = vperm.xlu0 %1047, %v1046
    %v1049 = vpop.permute.xlu0 %1048
    %vm1050 = vcmp.eq.s32.totalorder %v1049, 1
    %v1051 = vsel %vm1050, %v1044, %v968
    %v1052 = vld [vmem:[#allocation2 + $0x48] sm:$0xff]
    %v1054 = vsel %vm286, %v1044, 0
    %1056 = vmatprep.subr.mxu0 0.0
    %1057 = vmatpush1.msra.mxu0 0.0
    %1058 = vmatprep.subr.mxu0 0.0
    %1059 = vmatpush1.msra.mxu0 0.0
    %1060 = vmatprep.subr.mxu0 0.0
    %1061 = vmatpush1.msra.mxu0 0.0
    %1062 = vmatprep.subr.mxu0 0.0
    %1063 = vmatpush1.msra.mxu0 0.0
    %1064 = vmatprep.subr.mxu0 0.0
    %1065 = vmatpush1.msra.mxu0 0.0
    %1066 = vmatprep.subr.mxu0 0.0
    %1067 = vmatpush1.msra.mxu0 0.0
    %1068 = vmatprep.subr.mxu0 0.0
    %1069 = vmatpush1.msra.mxu0 0.0
    %1070 = vmatprep.subr.mxu0 0.0
    %1071 = vmatpush1.msra.mxu0 0.0
    %1072 = vmatprep.subr.mxu0 0.0
    %1073 = vmatpush1.msra.mxu0 0.0
    %1074 = vmatprep.subr.mxu0 0.0
    %1075 = vmatpush1.msra.mxu0 0.0
    %1076 = vmatprep.subr.mxu0 0.0
    %1077 = vmatpush1.msra.mxu0 0.0
    %1078 = vmatprep.subr.mxu0 0.0
    %1079 = vmatpush1.msra.mxu0 0.0
    %1080 = vmatprep.subr.mxu0 0.0
    %1081 = vmatpush1.msra.mxu0 %v302
    %1082 = vmatprep.subr.mxu0 0.0
    %1083 = vmatpush1.msra.mxu0 %v301
    %1084 = vmatprep.subr.mxu0 0.0
    %1085 = vmatpush1.msra.mxu0 %v300
    %1086 = vmatprep.subr.mxu0 0.0
    %1087 = vmatpush1.msra.mxu0 %v299
    %1088 = vmatprep.subr.mxu0 0.0
    %1089 = vmatpush2.msra.mxu0 0.0
    %1090 = vmatprep.subr.mxu0 0.0
    %1091 = vmatpush2.msra.mxu0 0.0
    %1092 = vmatprep.subr.mxu0 0.0
    %1093 = vmatpush2.msra.mxu0 0.0
    %1094 = vmatprep.subr.mxu0 0.0
    %1095 = vmatpush2.msra.mxu0 0.0
    %1096 = vmatprep.subr.mxu0 0.0
    %1097 = vmatpush2.msra.mxu0 0.0
    %1098 = vmatprep.subr.mxu0 0.0
    %1099 = vmatpush2.msra.mxu0 0.0
    %1100 = vmatprep.subr.mxu0 0.0
    %1101 = vmatpush2.msra.mxu0 0.0
    %1102 = vmatprep.subr.mxu0 0.0
    %1103 = vmatpush2.msra.mxu0 0.0
    %1104 = vmatprep.subr.mxu0 0.0
    %1105 = vmatpush2.msra.mxu0 0.0
    %1106 = vmatprep.subr.mxu0 0.0
    %1107 = vmatpush2.msra.mxu0 0.0
    %1108 = vmatprep.subr.mxu0 0.0
    %1109 = vmatpush2.msra.mxu0 0.0
    %1110 = vmatprep.subr.mxu0 0.0
    %1111 = vmatpush2.msra.mxu0 0.0
    %1112 = vmatprep.subr.mxu0 0.0
    %1113 = vmatpush2.msra.mxu0 0.0
    %1114 = vmatprep.subr.mxu0 0.0
    %1115 = vmatpush2.msra.mxu0 0.0
    %1116 = vmatprep.subr.mxu0 0.0
    %1117 = vmatpush2.msra.mxu0 0.0
    %1118 = vmatprep.subr.mxu0 0.0
    %1119 = vmatpush2.msra.mxu0 0.0
    %1120 = vmatprep.mubr.f32.mxu0 0.0
    %1121 = vmatmul.mubr.f32.gmra.mxu0 %v1054
    %v1122 = vpop.f32.mrf.mxu0
    %v1123 = vadd.f32 0.0, %v1122
    %v1124 = vpop.f32.mrf.mxu0
    %1125 = vdwg.mxu0
    %v1126 = vadd.f32 %v1052, %v1123
    %v1127 = vtanh.pop %v1126
    %vm1128 = vcmp.eq.s32.totalorder %v304, 9
    %v1129 = vsel %vm1128, 1, 0
    %1130 = vset.pattern.permute.xlu0 0
    %1131 = vperm.xlu0 %1130, %v1129
    %v1132 = vpop.permute.xlu0 %1131
    %vm1133 = vcmp.eq.s32.totalorder %v1132, 1
    %v1134 = vsel %vm1133, %v1127, %v1051
    %v1135 = vld [vmem:[#allocation2 + $0x50] sm:$0xff]
    %v1137 = vsel %vm286, %v1127, 0
    %1139 = vmatprep.subr.mxu0 0.0
    %1140 = vmatpush1.msra.mxu0 0.0
    %1141 = vmatprep.subr.mxu0 0.0
    %1142 = vmatpush1.msra.mxu0 0.0
    %1143 = vmatprep.subr.mxu0 0.0
    %1144 = vmatpush1.msra.mxu0 0.0
    %1145 = vmatprep.subr.mxu0 0.0
    %1146 = vmatpush1.msra.mxu0 0.0
    %1147 = vmatprep.subr.mxu0 0.0
    %1148 = vmatpush1.msra.mxu0 0.0
    %1149 = vmatprep.subr.mxu0 0.0
    %1150 = vmatpush1.msra.mxu0 0.0
    %1151 = vmatprep.subr.mxu0 0.0
    %1152 = vmatpush1.msra.mxu0 0.0
    %1153 = vmatprep.subr.mxu0 0.0
    %1154 = vmatpush1.msra.mxu0 0.0
    %1155 = vmatprep.subr.mxu0 0.0
    %1156 = vmatpush1.msra.mxu0 0.0
    %1157 = vmatprep.subr.mxu0 0.0
    %1158 = vmatpush1.msra.mxu0 0.0
    %1159 = vmatprep.subr.mxu0 0.0
    %1160 = vmatpush1.msra.mxu0 0.0
    %1161 = vmatprep.subr.mxu0 0.0
    %1162 = vmatpush1.msra.mxu0 0.0
    %1163 = vmatprep.subr.mxu0 0.0
    %1164 = vmatpush1.msra.mxu0 %v302
    %1165 = vmatprep.subr.mxu0 0.0
    %1166 = vmatpush1.msra.mxu0 %v301
    %1167 = vmatprep.subr.mxu0 0.0
    %1168 = vmatpush1.msra.mxu0 %v300
    %1169 = vmatprep.subr.mxu0 0.0
    %1170 = vmatpush1.msra.mxu0 %v299
    %1171 = vmatprep.subr.mxu0 0.0
    %1172 = vmatpush2.msra.mxu0 0.0
    %1173 = vmatprep.subr.mxu0 0.0
    %1174 = vmatpush2.msra.mxu0 0.0
    %1175 = vmatprep.subr.mxu0 0.0
    %1176 = vmatpush2.msra.mxu0 0.0
    %1177 = vmatprep.subr.mxu0 0.0
    %1178 = vmatpush2.msra.mxu0 0.0
    %1179 = vmatprep.subr.mxu0 0.0
    %1180 = vmatpush2.msra.mxu0 0.0
    %1181 = vmatprep.subr.mxu0 0.0
    %1182 = vmatpush2.msra.mxu0 0.0
    %1183 = vmatprep.subr.mxu0 0.0
    %1184 = vmatpush2.msra.mxu0 0.0
    %1185 = vmatprep.subr.mxu0 0.0
    %1186 = vmatpush2.msra.mxu0 0.0
    %1187 = vmatprep.subr.mxu0 0.0
    %1188 = vmatpush2.msra.mxu0 0.0
    %1189 = vmatprep.subr.mxu0 0.0
    %1190 = vmatpush2.msra.mxu0 0.0
    %1191 = vmatprep.subr.mxu0 0.0
    %1192 = vmatpush2.msra.mxu0 0.0
    %1193 = vmatprep.subr.mxu0 0.0
    %1194 = vmatpush2.msra.mxu0 0.0
    %1195 = vmatprep.subr.mxu0 0.0
    %1196 = vmatpush2.msra.mxu0 0.0
    %1197 = vmatprep.subr.mxu0 0.0
    %1198 = vmatpush2.msra.mxu0 0.0
    %1199 = vmatprep.subr.mxu0 0.0
    %1200 = vmatpush2.msra.mxu0 0.0
    %1201 = vmatprep.subr.mxu0 0.0
    %1202 = vmatpush2.msra.mxu0 0.0
    %1203 = vmatprep.mubr.f32.mxu0 0.0
    %1204 = vmatmul.mubr.f32.gmra.mxu0 %v1137
    %v1205 = vpop.f32.mrf.mxu0
    %v1206 = vadd.f32 0.0, %v1205
    %v1207 = vpop.f32.mrf.mxu0
    %1208 = vdwg.mxu0
    %v1209 = vadd.f32 %v1135, %v1206
    %v1210 = vtanh.pop %v1209
    %vm1211 = vcmp.eq.s32.totalorder %v304, 10
    %v1212 = vsel %vm1211, 1, 0
    %1213 = vset.pattern.permute.xlu0 0
    %1214 = vperm.xlu0 %1213, %v1212
    %v1215 = vpop.permute.xlu0 %1214
    %vm1216 = vcmp.eq.s32.totalorder %v1215, 1
    %v1217 = vsel %vm1216, %v1210, %v1134
    %v1218 = vld [vmem:[#allocation2 + $0x58] sm:$0xff]
    %v1220 = vsel %vm286, %v1210, 0
    %1222 = vmatprep.subr.mxu0 0.0
    %1223 = vmatpush1.msra.mxu0 0.0
    %1224 = vmatprep.subr.mxu0 0.0
    %1225 = vmatpush1.msra.mxu0 0.0
    %1226 = vmatprep.subr.mxu0 0.0
    %1227 = vmatpush1.msra.mxu0 0.0
    %1228 = vmatprep.subr.mxu0 0.0
    %1229 = vmatpush1.msra.mxu0 0.0
    %1230 = vmatprep.subr.mxu0 0.0
    %1231 = vmatpush1.msra.mxu0 0.0
    %1232 = vmatprep.subr.mxu0 0.0
    %1233 = vmatpush1.msra.mxu0 0.0
    %1234 = vmatprep.subr.mxu0 0.0
    %1235 = vmatpush1.msra.mxu0 0.0
    %1236 = vmatprep.subr.mxu0 0.0
    %1237 = vmatpush1.msra.mxu0 0.0
    %1238 = vmatprep.subr.mxu0 0.0
    %1239 = vmatpush1.msra.mxu0 0.0
    %1240 = vmatprep.subr.mxu0 0.0
    %1241 = vmatpush1.msra.mxu0 0.0
    %1242 = vmatprep.subr.mxu0 0.0
    %1243 = vmatpush1.msra.mxu0 0.0
    %1244 = vmatprep.subr.mxu0 0.0
    %1245 = vmatpush1.msra.mxu0 0.0
    %1246 = vmatprep.subr.mxu0 0.0
    %1247 = vmatpush1.msra.mxu0 %v302
    %1248 = vmatprep.subr.mxu0 0.0
    %1249 = vmatpush1.msra.mxu0 %v301
    %1250 = vmatprep.subr.mxu0 0.0
    %1251 = vmatpush1.msra.mxu0 %v300
    %1252 = vmatprep.subr.mxu0 0.0
    %1253 = vmatpush1.msra.mxu0 %v299
    %1254 = vmatprep.subr.mxu0 0.0
    %1255 = vmatpush2.msra.mxu0 0.0
    %1256 = vmatprep.subr.mxu0 0.0
    %1257 = vmatpush2.msra.mxu0 0.0
    %1258 = vmatprep.subr.mxu0 0.0
    %1259 = vmatpush2.msra.mxu0 0.0
    %1260 = vmatprep.subr.mxu0 0.0
    %1261 = vmatpush2.msra.mxu0 0.0
    %1262 = vmatprep.subr.mxu0 0.0
    %1263 = vmatpush2.msra.mxu0 0.0
    %1264 = vmatprep.subr.mxu0 0.0
    %1265 = vmatpush2.msra.mxu0 0.0
    %1266 = vmatprep.subr.mxu0 0.0
    %1267 = vmatpush2.msra.mxu0 0.0
    %1268 = vmatprep.subr.mxu0 0.0
    %1269 = vmatpush2.msra.mxu0 0.0
    %1270 = vmatprep.subr.mxu0 0.0
    %1271 = vmatpush2.msra.mxu0 0.0
    %1272 = vmatprep.subr.mxu0 0.0
    %1273 = vmatpush2.msra.mxu0 0.0
    %1274 = vmatprep.subr.mxu0 0.0
    %1275 = vmatpush2.msra.mxu0 0.0
    %1276 = vmatprep.subr.mxu0 0.0
    %1277 = vmatpush2.msra.mxu0 0.0
    %1278 = vmatprep.subr.mxu0 0.0
    %1279 = vmatpush2.msra.mxu0 0.0
    %1280 = vmatprep.subr.mxu0 0.0
    %1281 = vmatpush2.msra.mxu0 0.0
    %1282 = vmatprep.subr.mxu0 0.0
    %1283 = vmatpush2.msra.mxu0 0.0
    %1284 = vmatprep.subr.mxu0 0.0
    %1285 = vmatpush2.msra.mxu0 0.0
    %1286 = vmatprep.mubr.f32.mxu0 0.0
    %1287 = vmatmul.mubr.f32.gmra.mxu0 %v1220
    %v1288 = vpop.f32.mrf.mxu0
    %v1289 = vadd.f32 0.0, %v1288
    %v1290 = vpop.f32.mrf.mxu0
    %1291 = vdwg.mxu0
    %v1292 = vadd.f32 %v1218, %v1289
    %v1293 = vtanh.pop %v1292
    %vm1294 = vcmp.eq.s32.totalorder %v304, 11
    %v1295 = vsel %vm1294, 1, 0
    %1296 = vset.pattern.permute.xlu0 0
    %1297 = vperm.xlu0 %1296, %v1295
    %v1298 = vpop.permute.xlu0 %1297
    %vm1299 = vcmp.eq.s32.totalorder %v1298, 1
    %v1300 = vsel %vm1299, %v1293, %v1217
    %v1301 = vld [vmem:[%s4] sm:$0xff]
    %v1302 = vld [vmem:[%s4 + $0x8] sm:$0xff]
    %v1303 = vld [vmem:[%s4 + $0x10] sm:$0xff]
    %v1304 = vld [vmem:[%s4 + $0x18] sm:$0xff]
    %v1305 = vld [vmem:[%s5] sm:$0x1]
    %v1307 = vlaneseq
    %v1308 = vshrl.u32 %v1307, 7
    %v1309 = vsub.s32 0, %v1308
    %v1310 = vrot.slane %v1305, %v1309
    %v1313 = vsel %vm286, %v1300, 0
    %1315 = vmatprep.subr.mxu0 0.0
    %1316 = vmatpush1.msra.mxu0 0.0
    %1317 = vmatprep.subr.mxu0 0.0
    %1318 = vmatpush1.msra.mxu0 0.0
    %1319 = vmatprep.subr.mxu0 0.0
    %1320 = vmatpush1.msra.mxu0 0.0
    %1321 = vmatprep.subr.mxu0 0.0
    %1322 = vmatpush1.msra.mxu0 0.0
    %1323 = vmatprep.subr.mxu0 0.0
    %1324 = vmatpush1.msra.mxu0 0.0
    %1325 = vmatprep.subr.mxu0 0.0
    %1326 = vmatpush1.msra.mxu0 0.0
    %1327 = vmatprep.subr.mxu0 0.0
    %1328 = vmatpush1.msra.mxu0 0.0
    %1329 = vmatprep.subr.mxu0 0.0
    %1330 = vmatpush1.msra.mxu0 0.0
    %1331 = vmatprep.subr.mxu0 0.0
    %1332 = vmatpush1.msra.mxu0 0.0
    %1333 = vmatprep.subr.mxu0 0.0
    %1334 = vmatpush1.msra.mxu0 0.0
    %1335 = vmatprep.subr.mxu0 0.0
    %1336 = vmatpush1.msra.mxu0 0.0
    %1337 = vmatprep.subr.mxu0 0.0
    %1338 = vmatpush1.msra.mxu0 0.0
    %1339 = vmatprep.subr.mxu0 0.0
    %1340 = vmatpush1.msra.mxu0 %v1304
    %1341 = vmatprep.subr.mxu0 0.0
    %1342 = vmatpush1.msra.mxu0 %v1303
    %1343 = vmatprep.subr.mxu0 0.0
    %1344 = vmatpush1.msra.mxu0 %v1302
    %1345 = vmatprep.subr.mxu0 0.0
    %1346 = vmatpush1.msra.mxu0 %v1301
    %1347 = vmatprep.subr.mxu0 0.0
    %1348 = vmatpush2.msra.mxu0 0.0
    %1349 = vmatprep.subr.mxu0 0.0
    %1350 = vmatpush2.msra.mxu0 0.0
    %1351 = vmatprep.subr.mxu0 0.0
    %1352 = vmatpush2.msra.mxu0 0.0
    %1353 = vmatprep.subr.mxu0 0.0
    %1354 = vmatpush2.msra.mxu0 0.0
    %1355 = vmatprep.subr.mxu0 0.0
    %1356 = vmatpush2.msra.mxu0 0.0
    %1357 = vmatprep.subr.mxu0 0.0
    %1358 = vmatpush2.msra.mxu0 0.0
    %1359 = vmatprep.subr.mxu0 0.0
    %1360 = vmatpush2.msra.mxu0 0.0
    %1361 = vmatprep.subr.mxu0 0.0
    %1362 = vmatpush2.msra.mxu0 0.0
    %1363 = vmatprep.subr.mxu0 0.0
    %1364 = vmatpush2.msra.mxu0 0.0
    %1365 = vmatprep.subr.mxu0 0.0
    %1366 = vmatpush2.msra.mxu0 0.0
    %1367 = vmatprep.subr.mxu0 0.0
    %1368 = vmatpush2.msra.mxu0 0.0
    %1369 = vmatprep.subr.mxu0 0.0
    %1370 = vmatpush2.msra.mxu0 0.0
    %1371 = vmatprep.subr.mxu0 0.0
    %1372 = vmatpush2.msra.mxu0 0.0
    %1373 = vmatprep.subr.mxu0 0.0
    %1374 = vmatpush2.msra.mxu0 0.0
    %1375 = vmatprep.subr.mxu0 0.0
    %1376 = vmatpush2.msra.mxu0 0.0
    %1377 = vmatprep.subr.mxu0 0.0
    %1378 = vmatpush2.msra.mxu0 0.0
    %1379 = vmatprep.mubr.f32.mxu0 0.0
    %1380 = vmatmul.mubr.f32.gmra.mxu0 %v1313
    %v1381 = vpop.f32.mrf.mxu0
    %v1382 = vadd.f32 %v1310, %v1381
    %v1383 = vpop.f32.mrf.mxu0
    %1384 = vdwg.mxu0
    %v1385 = vmax.f32 %v1382, 0.0
    %v1386 = vld [vmem:[%s6] sm:$0xff]
    %v1387 = vld [vmem:[%s6 + $0x8] sm:$0xff]
    %v1388 = vld [vmem:[%s6 + $0x10] sm:$0xff]
    %v1389 = vld [vmem:[%s6 + $0x18] sm:$0xff]
    %v1390 = vld [vmem:[%s7] sm:$0x1]
    %v1392 = vlaneseq
    %v1393 = vshrl.u32 %v1392, 7
    %v1394 = vsub.s32 0, %v1393
    %v1395 = vrot.slane %v1390, %v1394
    %v1398 = vsel %vm286, %v1385, 0
    %1400 = vmatprep.subr.mxu0 0.0
    %1401 = vmatpush1.msra.mxu0 0.0
    %1402 = vmatprep.subr.mxu0 0.0
    %1403 = vmatpush1.msra.mxu0 0.0
    %1404 = vmatprep.subr.mxu0 0.0
    %1405 = vmatpush1.msra.mxu0 0.0
    %1406 = vmatprep.subr.mxu0 0.0
    %1407 = vmatpush1.msra.mxu0 0.0
    %1408 = vmatprep.subr.mxu0 0.0
    %1409 = vmatpush1.msra.mxu0 0.0
    %1410 = vmatprep.subr.mxu0 0.0
    %1411 = vmatpush1.msra.mxu0 0.0
    %1412 = vmatprep.subr.mxu0 0.0
    %1413 = vmatpush1.msra.mxu0 0.0
    %1414 = vmatprep.subr.mxu0 0.0
    %1415 = vmatpush1.msra.mxu0 0.0
    %1416 = vmatprep.subr.mxu0 0.0
    %1417 = vmatpush1.msra.mxu0 0.0
    %1418 = vmatprep.subr.mxu0 0.0
    %1419 = vmatpush1.msra.mxu0 0.0
    %1420 = vmatprep.subr.mxu0 0.0
    %1421 = vmatpush1.msra.mxu0 0.0
    %1422 = vmatprep.subr.mxu0 0.0
    %1423 = vmatpush1.msra.mxu0 0.0
    %1424 = vmatprep.subr.mxu0 0.0
    %1425 = vmatpush1.msra.mxu0 %v1389
    %1426 = vmatprep.subr.mxu0 0.0
    %1427 = vmatpush1.msra.mxu0 %v1388
    %1428 = vmatprep.subr.mxu0 0.0
    %1429 = vmatpush1.msra.mxu0 %v1387
    %1430 = vmatprep.subr.mxu0 0.0
    %1431 = vmatpush1.msra.mxu0 %v1386
    %1432 = vmatprep.subr.mxu0 0.0
    %1433 = vmatpush2.msra.mxu0 0.0
    %1434 = vmatprep.subr.mxu0 0.0
    %1435 = vmatpush2.msra.mxu0 0.0
    %1436 = vmatprep.subr.mxu0 0.0
    %1437 = vmatpush2.msra.mxu0 0.0
    %1438 = vmatprep.subr.mxu0 0.0
    %1439 = vmatpush2.msra.mxu0 0.0
    %1440 = vmatprep.subr.mxu0 0.0
    %1441 = vmatpush2.msra.mxu0 0.0
    %1442 = vmatprep.subr.mxu0 0.0
    %1443 = vmatpush2.msra.mxu0 0.0
    %1444 = vmatprep.subr.mxu0 0.0
    %1445 = vmatpush2.msra.mxu0 0.0
    %1446 = vmatprep.subr.mxu0 0.0
    %1447 = vmatpush2.msra.mxu0 0.0
    %1448 = vmatprep.subr.mxu0 0.0
    %1449 = vmatpush2.msra.mxu0 0.0
    %1450 = vmatprep.subr.mxu0 0.0
    %1451 = vmatpush2.msra.mxu0 0.0
    %1452 = vmatprep.subr.mxu0 0.0
    %1453 = vmatpush2.msra.mxu0 0.0
    %1454 = vmatprep.subr.mxu0 0.0
    %1455 = vmatpush2.msra.mxu0 0.0
    %1456 = vmatprep.subr.mxu0 0.0
    %1457 = vmatpush2.msra.mxu0 0.0
    %1458 = vmatprep.subr.mxu0 0.0
    %1459 = vmatpush2.msra.mxu0 0.0
    %1460 = vmatprep.subr.mxu0 0.0
    %1461 = vmatpush2.msra.mxu0 0.0
    %1462 = vmatprep.subr.mxu0 0.0
    %1463 = vmatpush2.msra.mxu0 0.0
    %1464 = vmatprep.mubr.f32.mxu0 0.0
    %1465 = vmatmul.mubr.f32.gmra.mxu0 %v1398
    %v1466 = vpop.f32.mrf.mxu0
    %v1467 = vadd.f32 %v1395, %v1466
    %v1468 = vpop.f32.mrf.mxu0
    %1469 = vdwg.mxu0
    %1470 = vst [vmem:[#allocation3] sm:$0xff] %v1467
    // Predicated region
    $region34: #{tpu_custom_call.1} parent=1 // pred_check
      _
    $region35: #{tpu_custom_call.1} parent=1 // pred_check_branch
      %1472 = sbr.rel (0) target = $region37
    $region36: #{tpu_custom_call.1} parent=1 // pred_region
      %s1474 = ssub.s32 128, 128
      %1475 = vsyncadd [#allocation4], %s1474
      %s1477 = sshll.u32 [#allocation3], 4
      %s1478 = int_to_ptr.vmem [resolvable:$true] %s1477
      %1480 = dma.vmem_to_hbm [thread:$0]  %s1478, 128, %s8, [#allocation4]
    $region37: #{tpu_custom_call.1} parent=1 // pred_fallthru
      _
    // Predicated region
    $region38: #{tpu_custom_call.1} parent=1 // pred_check
      _
    $region39: #{tpu_custom_call.1} parent=1 // pred_check_branch
      %1482 = sbr.rel (0) target = $region41
    $region40: #{tpu_custom_call.1} parent=1 // pred_region
      %1483 = dma.done [#allocation4], 128
    $region41: #{tpu_custom_call.1} parent=1 // pred_fallthru
      _
    %1484 = vsyncpa [#allocation4], 1

</llo_original>
